<compile_context>
chip_gen: v7x
topology: tpu7x:2x2x1
jax: 0.10.0
libtpu: 0.0.40
codegen_flags: <defaults>
</compile_context>

<pallas_src>
import functools

import jax
import jax.numpy as jnp
from jax.experimental import pallas as pl
from jax.experimental.pallas import tpu as pltpu


def _grouped_bmm_kernel(a_ref, b_ref, o_ref, *, operand_dtype):
    # a_ref: (G, M, K), b_ref: (G, K, N), o_ref: (G, M, N)
    a = a_ref[...]
    b = b_ref[...]
    if operand_dtype is not None:
        a = a.astype(operand_dtype)
        b = b.astype(operand_dtype)
    o_ref[...] = jnp.einsum(
        "gmk,gkn->gmn", a, b, preferred_element_type=jnp.float32
    ).astype(o_ref.dtype)


def _round_up(x, m):
    return ((x + m - 1) // m) * m


def _padded_tile_bytes(rows, cols, itemsize):
    """VMEM footprint of a (rows, cols) tile under (8,128) 32-bit tiling
    (sub-32-bit dtypes pack along sublanes)."""
    sublane = 8 * max(1, 4 // itemsize)
    return _round_up(rows, sublane) * _round_up(cols, 128) * itemsize


def _vmem_limits():
    """(vmem_limit_bytes for CompilerParams, block-choice budget)."""
    try:
        cap = int(getattr(pltpu.get_tpu_info(), "vmem_capacity_bytes"))
    except Exception:
        cap = 64 << 20  # conservative: v7x per-TC physical VMEM
    limit = min(cap // 2, 48 << 20)      # 32 MiB on v7x, 48 MiB on v5e/v6e
    budget = (limit * 3) // 4            # headroom for f32 accum temps / spills
    return limit, budget


def _choose_group_size(num_bh, per_head_pipelined, per_head_resident, budget,
                       min_steps=4):
    """Largest head-group G (divisor of num_bh) whose footprint fits `budget`,
    preferring >= min_steps grid steps (>= 2 per v7x TensorCore) so DMA and
    compute overlap; fall back to an even step count, then to the largest fit."""
    divisors = [g for g in range(1, num_bh + 1) if num_bh % g == 0]
    fit = [g for g in divisors
           if 2 * g * per_head_pipelined + g * per_head_resident <= budget]
    if not fit:
        return 1
    pipelined = [g for g in fit if num_bh // g >= min_steps]
    if pipelined:
        return max(pipelined)
    even = [g for g in fit if (num_bh // g) % 2 == 0]
    return max(even) if even else max(fit)


def batched_matmul(a, b, *, use_bf16_operands=True, out_dtype=None):
    """torch.matmul semantics for 4-D inputs: (B, H, M, K) @ (B, H, K, N) -> (B, H, M, N)."""
    B, H, M, K = a.shape
    B2, H2, K2, N = b.shape
    assert (B, H, K) == (B2, H2, K2), "shape mismatch"

    BH = B * H
    a_flat = a.reshape(BH, M, K)
    b_flat = b.reshape(BH, K, N)

    out_dtype = a.dtype if out_dtype is None else out_dtype
    in_itemsize = jnp.dtype(a.dtype).itemsize
    out_itemsize = jnp.dtype(out_dtype).itemsize

    vmem_limit, vmem_budget = _vmem_limits()

    # Padding-aware per-head VMEM footprint (inputs land in VMEM at their HBM
    # dtype; the bf16 cast happens in-kernel and costs no extra VMEM tiles).
    a_bytes = _padded_tile_bytes(M, K, in_itemsize)
    b_bytes = _padded_tile_bytes(K, N, in_itemsize)
    o_bytes = _padded_tile_bytes(M, N, out_itemsize)
    acc_bytes = _padded_tile_bytes(M, N, 4)  # f32 accumulation temporary
    per_head_pipelined = a_bytes + b_bytes + o_bytes  # double-buffered by Pallas
    per_head_resident = acc_bytes

    G = _choose_group_size(BH, per_head_pipelined, per_head_resident, vmem_budget)
    num_steps = BH // G

    operand_dtype = jnp.bfloat16 if use_bf16_operands else None
    kernel = functools.partial(_grouped_bmm_kernel, operand_dtype=operand_dtype)

    cost = pl.CostEstimate(
        flops=2 * BH * M * N * K,
        transcendentals=0,
        bytes_accessed=(BH * (M * K + K * N) * in_itemsize
                        + BH * M * N * out_itemsize),
    )

    out_flat = pl.pallas_call(
        kernel,
        out_shape=jax.ShapeDtypeStruct((BH, M, N), out_dtype),
        grid_spec=pltpu.PrefetchScalarGridSpec(
            num_scalar_prefetch=0,
            grid=(num_steps,),
            in_specs=[
                pl.BlockSpec((G, M, K), lambda g: (g, 0, 0)),
                pl.BlockSpec((G, K, N), lambda g: (g, 0, 0)),
            ],
            out_specs=pl.BlockSpec((G, M, N), lambda g: (g, 0, 0)),
        ),
        compiler_params=pltpu.CompilerParams(
            dimension_semantics=("parallel",),
            vmem_limit_bytes=int(vmem_limit),
        ),
        cost_estimate=cost,
    )(a_flat, b_flat)

    return out_flat.reshape(B, H, M, N)


if __name__ == "__main__":
    key = jax.random.PRNGKey(0)
    k1, k2 = jax.random.split(key)

    # Shapes from the module's forward: (1, 12, 384, 64) @ (1, 12, 64, 384)
    x508 = jax.random.normal(k1, (1, 12, 384, 64), dtype=jnp.float32)
    x509 = jax.random.normal(k2, (1, 12, 64, 384), dtype=jnp.float32)

    out = batched_matmul(x508, x509)
    jax.block_until_ready(out)

    assert out.shape == (1, 12, 384, 384)
    assert out.dtype == x508.dtype

    # Tight check against a reference computed the same way (bf16 operands,
    # f32 accumulation).
    ref_bf16 = jax.lax.dot_general(
        x508.astype(jnp.bfloat16), x509.astype(jnp.bfloat16),
        dimension_numbers=(((3,), (2,)), ((0, 1), (0, 1))),
        preferred_element_type=jnp.float32,
    )
    assert jnp.allclose(out, ref_bf16, atol=2e-2, rtol=2e-2)

    # Loose sanity check against the full-precision f32 reference (bf16
    # operand rounding over K=64 bounds the absolute error well below 0.5).
    ref_f32 = jnp.matmul(x508, x509)
    assert jnp.allclose(out, ref_f32, atol=0.5, rtol=5e-2)

    print("KERNEL_OK")
</pallas_src>

<mosaic_0001>
module attributes {stable_mosaic.version = 11 : i64} {
  func.func @_grouped_bmm_kernel(%arg0: i32, %arg1: memref<3x384x64xf32, #tpu.memory_space<vmem>>, %arg2: memref<3x64x384xf32, #tpu.memory_space<vmem>>, %arg3: memref<3x384x384xf32, #tpu.memory_space<vmem>>) attributes {dimension_semantics = [#tpu.dimension_semantics<parallel>], iteration_bounds = array<i64: 4>, scalar_prefetch = 0 : i64, scratch_operands = 0 : i64, tpu.core_type = #tpu.core_type<tc>, window_params = [{transform_indices = @transform_0, window_bounds = array<i64: 3, 384, 64>}, {transform_indices = @transform_1, window_bounds = array<i64: 3, 64, 384>}, {transform_indices = @transform_2, window_bounds = array<i64: 3, 384, 384>}]} {
    %c0 = arith.constant 0 : index
    %c0_0 = arith.constant 0 : index
    %c0_1 = arith.constant 0 : index
    %0 = vector.load %arg1[%c0, %c0_0, %c0_1] : memref<3x384x64xf32, #tpu.memory_space<vmem>>, vector<3x384x64xf32>
    %c0_2 = arith.constant 0 : index
    %c0_3 = arith.constant 0 : index
    %c0_4 = arith.constant 0 : index
    %1 = vector.load %arg2[%c0_2, %c0_3, %c0_4] : memref<3x64x384xf32, #tpu.memory_space<vmem>>, vector<3x64x384xf32>
    %2 = arith.truncf %0 : vector<3x384x64xf32> to vector<3x384x64xbf16>
    %3 = arith.truncf %1 : vector<3x64x384xf32> to vector<3x64x384xbf16>
    "tpu.trace_start"() <{level = 10 : i32, message = "gmk,gkn->gmn"}> : () -> ()
    %cst = arith.constant dense<0.000000e+00> : vector<3x384x384xf32>
    %4 = tpu.matmul %2, %3, %cst {dimension_numbers = #tpu.dot_dimension_numbers<[2], [1], [1], [2], [0, 0, 0, 1, 1, 2], [0], [0]>} : vector<3x384x64xbf16>, vector<3x64x384xbf16>, vector<3x384x384xf32> -> vector<3x384x384xf32>
    "tpu.trace_stop"() : () -> ()
    %c0_5 = arith.constant 0 : index
    %c0_6 = arith.constant 0 : index
    %c0_7 = arith.constant 0 : index
    %5 = vector.load %arg3[%c0_5, %c0_6, %c0_7] : memref<3x384x384xf32, #tpu.memory_space<vmem>>, vector<3x384x384xf32>
    tpu.vector_store %arg3[%c0_5, %c0_6, %c0_7], %4 {strides = array<i32>} : memref<3x384x384xf32, #tpu.memory_space<vmem>>, vector<3x384x384xf32>,
    return
  }
  func.func @transform_0(%arg0: i32) -> (i32, i32, i32) {
    %c0_i32 = arith.constant 0 : i32
    %c0_i32_0 = arith.constant 0 : i32
    %c0_i32_1 = arith.constant 0 : i32
    return %arg0, %c0_i32, %c0_i32_0 : i32, i32, i32
  }
  func.func @transform_1(%arg0: i32) -> (i32, i32, i32) {
    %c0_i32 = arith.constant 0 : i32
    %c0_i32_0 = arith.constant 0 : i32
    %c0_i32_1 = arith.constant 0 : i32
    return %arg0, %c0_i32, %c0_i32_0 : i32, i32, i32
  }
  func.func @transform_2(%arg0: i32) -> (i32, i32, i32) {
    %c0_i32 = arith.constant 0 : i32
    %c0_i32_0 = arith.constant 0 : i32
    %c0_i32_1 = arith.constant 0 : i32
    return %arg0, %c0_i32, %c0_i32_0 : i32, i32, i32
  }
}

</mosaic_0001>

<llo_original>
// kernel: tpu_custom_call.1
$region0: #{tpu_custom_call.1}
  #allocation0 [shape = 'u32[]', space=smem, size = 0x4, offset = 0x4, fixed_abs, tag = 'smem constant byte address 0x4 - core index']
  #allocation1 [shape = 'u32[144,128]{1,0:T(1,128)}', space=vmem, size = 0x12000, scoped, tag = 'internal scratch']
  %s0 = inlined_call_operand.vmem [shape: f32[12,384,64], index: 0, kind: input, shape index: {}]
  %s1 = inlined_call_operand.vmem [shape: f32[12,64,384], index: 1, kind: input, shape index: {}]
  %s2 = inlined_call_operand.hbm [shape: f32[12,384,384], index: 2, kind: output, shape index: {}]
  %s3 = sld [smem:[#allocation0]]
  $region41: #{tpu_custom_call.1} parent=0
    _
  %s5 = ssub.s32 1, %s3
  %s6 = scalar_select 0, %s5, %s3
  $region1: #{tpu_custom_call.1} parent=0
    #allocation2 [shape = 'u8[3538944]{0}', space=vmem, size = 0x360000, scoped, tag = 'output window, operand 0']
    #allocation3 [shape = 's32[2]{0}', space=sflag, size = 0x8, scoped, tag = 'scoped memory for tpu_custom_call.1']
    %7 = vsyncpa [#allocation3], 0
    %s8 = scalar_lea.sflag [#allocation3], 1
    %9 = vsyncpa %s8, 0
    loop: start=0, step=1, limit=6
    $region2: #{tpu_custom_call.1} parent=1 // loop_pre_header
      _
    $region3: #{tpu_custom_call.1} parent=1 // loop_header
      %s11 = sphi 0, %s15
      %p12 = scmp.ge.s32.totalorder %s11, 6
      %s21 = sphi 0, %s23
      %s24 = sphi 0, %s21
      %s25 = sphi 0, %s24
      %s41 = sphi 0, %s25
      %s47 = sphi 0, %s49
      %s50 = sphi 0, %s47
      %s51 = sphi 0, %s50
      %s67 = sphi 0, %s51
      %s73 = sphi 0, %s75
      %s76 = sphi 0, %s73
      %s77 = sphi 0, %s76
      %s93 = sphi 0, %s77
    $region4: #{tpu_custom_call.1} parent=1 // loop_header_branch
      %14 = sbr.rel (%p12) target = $region8
    $region5: #{tpu_custom_call.1} parent=1 // loop_body
      %s16 = ssub.s32 %s11, 1
      %s17 = ssub.s32 %s11, 2
      %s18 = sadd.s32 %s11, 1
      %s19 = ssub.s32 %s11, %s18
      %p20 = scmp.eq.s32.totalorder %s19, 0
      %s22 = sadd.s32 %s21, 1
      %s23 = scalar_select %p20, %s21, %s22
      %p26 = pneg %p20
      %p27 = scmp.eq.s32.totalorder %s11, 3
      %p28 = por %p26, %p27
      %p29 = scmp.ne.s32.totalorder %s21, %s24
      %p30 = scmp.eq.s32.totalorder %s11, 0
      %p31 = por %p29, %p30
      %p32 = scmp.ne.s32.totalorder %s21, %s24
      %p33 = scmp.eq.s32.totalorder %s16, 3
      %p34 = por %p32, %p33
      %p35 = scmp.ne.s32.totalorder %s24, %s25
      %p36 = scmp.eq.s32.totalorder %s16, 0
      %p37 = por %p35, %p36
      %p38 = scmp.ne.s32.totalorder %s24, %s25
      %p39 = scmp.eq.s32.totalorder %s17, 3
      %p40 = por %p38, %p39
      %p42 = scmp.ne.s32.totalorder %s25, %s41
      %p43 = scmp.eq.s32.totalorder %s17, 0
      %p44 = por %p42, %p43
      %s45 = ssub.s32 %s11, %s18
      %p46 = scmp.eq.s32.totalorder %s45, 0
      %s48 = sadd.s32 %s47, 1
      %s49 = scalar_select %p46, %s47, %s48
      %p52 = pneg %p46
      %p53 = scmp.eq.s32.totalorder %s11, 3
      %p54 = por %p52, %p53
      %p55 = scmp.ne.s32.totalorder %s47, %s50
      %p56 = scmp.eq.s32.totalorder %s11, 0
      %p57 = por %p55, %p56
      %p58 = scmp.ne.s32.totalorder %s47, %s50
      %p59 = scmp.eq.s32.totalorder %s16, 3
      %p60 = por %p58, %p59
      %p61 = scmp.ne.s32.totalorder %s50, %s51
      %p62 = scmp.eq.s32.totalorder %s16, 0
      %p63 = por %p61, %p62
      %p64 = scmp.ne.s32.totalorder %s50, %s51
      %p65 = scmp.eq.s32.totalorder %s17, 3
      %p66 = por %p64, %p65
      %p68 = scmp.ne.s32.totalorder %s51, %s67
      %p69 = scmp.eq.s32.totalorder %s17, 0
      %p70 = por %p68, %p69
      %s71 = ssub.s32 %s11, %s18
      %p72 = scmp.eq.s32.totalorder %s71, 0
      %s74 = sadd.s32 %s73, 1
      %s75 = scalar_select %p72, %s73, %s74
      %p78 = pneg %p72
      %p79 = scmp.eq.s32.totalorder %s11, 3
      %p80 = por %p78, %p79
      %p81 = scmp.ne.s32.totalorder %s73, %s76
      %p82 = scmp.eq.s32.totalorder %s11, 0
      %p83 = por %p81, %p82
      %p84 = scmp.ne.s32.totalorder %s73, %s76
      %p85 = scmp.eq.s32.totalorder %s16, 3
      %p86 = por %p84, %p85
      %p87 = scmp.ne.s32.totalorder %s76, %s77
      %p88 = scmp.eq.s32.totalorder %s16, 0
      %p89 = por %p87, %p88
      %p90 = scmp.ne.s32.totalorder %s76, %s77
      %p91 = scmp.eq.s32.totalorder %s17, 3
      %p92 = por %p90, %p91
      %p94 = scmp.ne.s32.totalorder %s77, %s93
      %p95 = scmp.eq.s32.totalorder %s17, 0
      %p96 = por %p94, %p95
      %p97 = scmp.le.s32.totalorder 1, %s11
      %p98 = scmp.lt.s32.totalorder %s11, 5
      %p99 = pnand %p97, %p98
      %p100 = pneg %p99
      // Predicated region
      $region9: #{tpu_custom_call.1} parent=5 // pred_check
        _
      $region10: #{tpu_custom_call.1} parent=5 // pred_check_branch
        %102 = sbr.rel (%p99) target = $region12
      $region11: #{tpu_custom_call.1} parent=5 // pred_region
        %s103 = ssub.s32 %s11, 1
      $region12: #{tpu_custom_call.1} parent=5 // pred_fallthru
        _
      %p104 = scmp.lt.s32.totalorder %s11, 4
      // Predicated region
      $region13: #{tpu_custom_call.1} parent=5 // pred_check
        %p105 = pneg %p104
      $region14: #{tpu_custom_call.1} parent=5 // pred_check_branch
        %107 = sbr.rel (%p105) target = $region16
      $region15: #{tpu_custom_call.1} parent=5 // pred_region
        // Predicated region
        $region17: #{tpu_custom_call.1} parent=15 // pred_check
          %p108 = pneg %p31
        $region18: #{tpu_custom_call.1} parent=15 // pred_check_branch
          %110 = sbr.rel (%p108) target = $region20
        $region19: #{tpu_custom_call.1} parent=15 // pred_region
          %s111 = smul.u32 3, %s11
          %p112 = scmp.lt.s32.totalorder %s111, 11
          %s113 = scalar_select %p112, %s111, 11
          %s114 = smul.addr %s113, 48
          %s115 = smul.addr %s114, 8
          %s116 = scalar_lea.vmem %s0, %s115
          %s117 = smul.u32 3, %s11
        $region20: #{tpu_custom_call.1} parent=15 // pred_fallthru
          _
        // Predicated region
        $region21: #{tpu_custom_call.1} parent=15 // pred_check
          %p118 = pneg %p57
        $region22: #{tpu_custom_call.1} parent=15 // pred_check_branch
          %120 = sbr.rel (%p118) target = $region24
        $region23: #{tpu_custom_call.1} parent=15 // pred_region
          %s121 = smul.u32 3, %s11
          %p122 = scmp.lt.s32.totalorder %s121, 11
          %s123 = scalar_select %p122, %s121, 11
          %s124 = smul.addr %s123, 24
          %s125 = smul.addr %s124, 8
          %s126 = scalar_lea.vmem %s1, %s125
          %s127 = smul.u32 3, %s11
        $region24: #{tpu_custom_call.1} parent=15 // pred_fallthru
          _
      $region16: #{tpu_custom_call.1} parent=5 // pred_fallthru
        _
      %p128 = scmp.le.s32.totalorder 1, %s11
      %p129 = scmp.lt.s32.totalorder %s11, 5
      %p130 = pnand %p128, %p129
      %p131 = pneg %p130
      // Predicated region
      $region25: #{tpu_custom_call.1} parent=5 // pred_check
        _
      $region26: #{tpu_custom_call.1} parent=5 // pred_check_branch
        %133 = sbr.rel (%p130) target = $region28
      $region27: #{tpu_custom_call.1} parent=5 // pred_region
        %s134 = ssub.s32 %s11, 1
        %s135 = smul.u32 3, %s16
        %p136 = scmp.lt.s32.totalorder %s135, 11
        %s137 = scalar_select %p136, %s135, 11
        %s138 = smul.addr %s137, 48
        %s139 = smul.addr %s138, 8
        %s140 = scalar_lea.vmem %s0, %s139
        %p141 = pneg %p37
        %p142 = pneg %p34
        %s143 = smul.u32 3, %s16
        %p144 = scmp.lt.s32.totalorder %s143, 11
        %s145 = scalar_select %p144, %s143, 11
        %s146 = smul.addr %s145, 24
        %s147 = smul.addr %s146, 8
        %s148 = scalar_lea.vmem %s1, %s147
        %p149 = pneg %p63
        %p150 = pneg %p60
        %p151 = pneg %p89
        %p152 = pneg %p86
        %s153 = sand.u32 %s76, 1
        %s154 = scalar_lea.sflag [#allocation3], %s153
        %s155 = sand.u32 %s76, 1
        %s156 = smul.addr %s155, 3456
        %s157 = scalar_lea.vmem [#allocation2], %s156
        %s158 = smul.u32 3, %s16
        %p159 = scmp.lt.s32.totalorder %s158, 11
        %s160 = scalar_select %p159, %s158, 11
        %s161 = smul.addr %s160, 48
        %s162 = smul.addr %s161, 8
        %s163 = scalar_lea.vmem %s0, %s162
        %s164 = smul.u32 3, %s16
        %s165 = smul.u32 3, %s16
        %p166 = scmp.lt.s32.totalorder %s165, 11
        %s167 = scalar_select %p166, %s165, 11
        %s168 = smul.addr %s167, 24
        %s169 = smul.addr %s168, 8
        %s170 = scalar_lea.vmem %s1, %s169
        %s171 = smul.u32 3, %s16
        %s172 = smul.u32 3, %s16
        %v174 = vld [vmem:[%s163] sm:$0xff]
        %v175 = vld [vmem:[%s163 + $0x8] sm:$0xff]
        %v176 = vld [vmem:[%s163 + $0x10] sm:$0xff]
        %v177 = vld [vmem:[%s163 + $0x18] sm:$0xff]
        %v178 = vld [vmem:[%s163 + $0x20] sm:$0xff]
        %v179 = vld [vmem:[%s163 + $0x28] sm:$0xff]
        %v180 = vld [vmem:[%s163 + $0x30] sm:$0xff]
        %v181 = vld [vmem:[%s163 + $0x38] sm:$0xff]
        %v182 = vld [vmem:[%s163 + $0x40] sm:$0xff]
        %v183 = vld [vmem:[%s163 + $0x48] sm:$0xff]
        %v184 = vld [vmem:[%s163 + $0x50] sm:$0xff]
        %v185 = vld [vmem:[%s163 + $0x58] sm:$0xff]
        %v186 = vld [vmem:[%s163 + $0x60] sm:$0xff]
        %v187 = vld [vmem:[%s163 + $0x68] sm:$0xff]
        %v188 = vld [vmem:[%s163 + $0x70] sm:$0xff]
        %v189 = vld [vmem:[%s163 + $0x78] sm:$0xff]
        %v190 = vld [vmem:[%s163 + $0x80] sm:$0xff]
        %v191 = vld [vmem:[%s163 + $0x88] sm:$0xff]
        %v192 = vld [vmem:[%s163 + $0x90] sm:$0xff]
        %v193 = vld [vmem:[%s163 + $0x98] sm:$0xff]
        %v194 = vld [vmem:[%s163 + $0xa0] sm:$0xff]
        %v195 = vld [vmem:[%s163 + $0xa8] sm:$0xff]
        %v196 = vld [vmem:[%s163 + $0xb0] sm:$0xff]
        %v197 = vld [vmem:[%s163 + $0xb8] sm:$0xff]
        %v198 = vld [vmem:[%s163 + $0xc0] sm:$0xff]
        %v199 = vld [vmem:[%s163 + $0xc8] sm:$0xff]
        %v200 = vld [vmem:[%s163 + $0xd0] sm:$0xff]
        %v201 = vld [vmem:[%s163 + $0xd8] sm:$0xff]
        %v202 = vld [vmem:[%s163 + $0xe0] sm:$0xff]
        %v203 = vld [vmem:[%s163 + $0xe8] sm:$0xff]
        %v204 = vld [vmem:[%s163 + $0xf0] sm:$0xff]
        %v205 = vld [vmem:[%s163 + $0xf8] sm:$0xff]
        %v206 = vld [vmem:[%s163 + $0x100] sm:$0xff]
        %v207 = vld [vmem:[%s163 + $0x108] sm:$0xff]
        %v208 = vld [vmem:[%s163 + $0x110] sm:$0xff]
        %v209 = vld [vmem:[%s163 + $0x118] sm:$0xff]
        %v210 = vld [vmem:[%s163 + $0x120] sm:$0xff]
        %v211 = vld [vmem:[%s163 + $0x128] sm:$0xff]
        %v212 = vld [vmem:[%s163 + $0x130] sm:$0xff]
        %v213 = vld [vmem:[%s163 + $0x138] sm:$0xff]
        %v214 = vld [vmem:[%s163 + $0x140] sm:$0xff]
        %v215 = vld [vmem:[%s163 + $0x148] sm:$0xff]
        %v216 = vld [vmem:[%s163 + $0x150] sm:$0xff]
        %v217 = vld [vmem:[%s163 + $0x158] sm:$0xff]
        %v218 = vld [vmem:[%s163 + $0x160] sm:$0xff]
        %v219 = vld [vmem:[%s163 + $0x168] sm:$0xff]
        %v220 = vld [vmem:[%s163 + $0x170] sm:$0xff]
        %v221 = vld [vmem:[%s163 + $0x178] sm:$0xff]
        %v222 = vld [vmem:[%s163 + $0x180] sm:$0xff]
        %v223 = vld [vmem:[%s163 + $0x188] sm:$0xff]
        %v224 = vld [vmem:[%s163 + $0x190] sm:$0xff]
        %v225 = vld [vmem:[%s163 + $0x198] sm:$0xff]
        %v226 = vld [vmem:[%s163 + $0x1a0] sm:$0xff]
        %v227 = vld [vmem:[%s163 + $0x1a8] sm:$0xff]
        %v228 = vld [vmem:[%s163 + $0x1b0] sm:$0xff]
        %v229 = vld [vmem:[%s163 + $0x1b8] sm:$0xff]
        %v230 = vld [vmem:[%s163 + $0x1c0] sm:$0xff]
        %v231 = vld [vmem:[%s163 + $0x1c8] sm:$0xff]
        %v232 = vld [vmem:[%s163 + $0x1d0] sm:$0xff]
        %v233 = vld [vmem:[%s163 + $0x1d8] sm:$0xff]
        %v234 = vld [vmem:[%s163 + $0x1e0] sm:$0xff]
        %v235 = vld [vmem:[%s163 + $0x1e8] sm:$0xff]
        %v236 = vld [vmem:[%s163 + $0x1f0] sm:$0xff]
        %v237 = vld [vmem:[%s163 + $0x1f8] sm:$0xff]
        %v238 = vld [vmem:[%s163 + $0x200] sm:$0xff]
        %v239 = vld [vmem:[%s163 + $0x208] sm:$0xff]
        %v240 = vld [vmem:[%s163 + $0x210] sm:$0xff]
        %v241 = vld [vmem:[%s163 + $0x218] sm:$0xff]
        %v242 = vld [vmem:[%s163 + $0x220] sm:$0xff]
        %v243 = vld [vmem:[%s163 + $0x228] sm:$0xff]
        %v244 = vld [vmem:[%s163 + $0x230] sm:$0xff]
        %v245 = vld [vmem:[%s163 + $0x238] sm:$0xff]
        %v246 = vld [vmem:[%s163 + $0x240] sm:$0xff]
        %v247 = vld [vmem:[%s163 + $0x248] sm:$0xff]
        %v248 = vld [vmem:[%s163 + $0x250] sm:$0xff]
        %v249 = vld [vmem:[%s163 + $0x258] sm:$0xff]
        %v250 = vld [vmem:[%s163 + $0x260] sm:$0xff]
        %v251 = vld [vmem:[%s163 + $0x268] sm:$0xff]
        %v252 = vld [vmem:[%s163 + $0x270] sm:$0xff]
        %v253 = vld [vmem:[%s163 + $0x278] sm:$0xff]
        %v254 = vld [vmem:[%s163 + $0x280] sm:$0xff]
        %v255 = vld [vmem:[%s163 + $0x288] sm:$0xff]
        %v256 = vld [vmem:[%s163 + $0x290] sm:$0xff]
        %v257 = vld [vmem:[%s163 + $0x298] sm:$0xff]
        %v258 = vld [vmem:[%s163 + $0x2a0] sm:$0xff]
        %v259 = vld [vmem:[%s163 + $0x2a8] sm:$0xff]
        %v260 = vld [vmem:[%s163 + $0x2b0] sm:$0xff]
        %v261 = vld [vmem:[%s163 + $0x2b8] sm:$0xff]
        %v262 = vld [vmem:[%s163 + $0x2c0] sm:$0xff]
        %v263 = vld [vmem:[%s163 + $0x2c8] sm:$0xff]
        %v264 = vld [vmem:[%s163 + $0x2d0] sm:$0xff]
        %v265 = vld [vmem:[%s163 + $0x2d8] sm:$0xff]
        %v266 = vld [vmem:[%s163 + $0x2e0] sm:$0xff]
        %v267 = vld [vmem:[%s163 + $0x2e8] sm:$0xff]
        %v268 = vld [vmem:[%s163 + $0x2f0] sm:$0xff]
        %v269 = vld [vmem:[%s163 + $0x2f8] sm:$0xff]
        %v270 = vld [vmem:[%s163 + $0x300] sm:$0xff]
        %v271 = vld [vmem:[%s163 + $0x308] sm:$0xff]
        %v272 = vld [vmem:[%s163 + $0x310] sm:$0xff]
        %v273 = vld [vmem:[%s163 + $0x318] sm:$0xff]
        %v274 = vld [vmem:[%s163 + $0x320] sm:$0xff]
        %v275 = vld [vmem:[%s163 + $0x328] sm:$0xff]
        %v276 = vld [vmem:[%s163 + $0x330] sm:$0xff]
        %v277 = vld [vmem:[%s163 + $0x338] sm:$0xff]
        %v278 = vld [vmem:[%s163 + $0x340] sm:$0xff]
        %v279 = vld [vmem:[%s163 + $0x348] sm:$0xff]
        %v280 = vld [vmem:[%s163 + $0x350] sm:$0xff]
        %v281 = vld [vmem:[%s163 + $0x358] sm:$0xff]
        %v282 = vld [vmem:[%s163 + $0x360] sm:$0xff]
        %v283 = vld [vmem:[%s163 + $0x368] sm:$0xff]
        %v284 = vld [vmem:[%s163 + $0x370] sm:$0xff]
        %v285 = vld [vmem:[%s163 + $0x378] sm:$0xff]
        %v286 = vld [vmem:[%s163 + $0x380] sm:$0xff]
        %v287 = vld [vmem:[%s163 + $0x388] sm:$0xff]
        %v288 = vld [vmem:[%s163 + $0x390] sm:$0xff]
        %v289 = vld [vmem:[%s163 + $0x398] sm:$0xff]
        %v290 = vld [vmem:[%s163 + $0x3a0] sm:$0xff]
        %v291 = vld [vmem:[%s163 + $0x3a8] sm:$0xff]
        %v292 = vld [vmem:[%s163 + $0x3b0] sm:$0xff]
        %v293 = vld [vmem:[%s163 + $0x3b8] sm:$0xff]
        %v294 = vld [vmem:[%s163 + $0x3c0] sm:$0xff]
        %v295 = vld [vmem:[%s163 + $0x3c8] sm:$0xff]
        %v296 = vld [vmem:[%s163 + $0x3d0] sm:$0xff]
        %v297 = vld [vmem:[%s163 + $0x3d8] sm:$0xff]
        %v298 = vld [vmem:[%s163 + $0x3e0] sm:$0xff]
        %v299 = vld [vmem:[%s163 + $0x3e8] sm:$0xff]
        %v300 = vld [vmem:[%s163 + $0x3f0] sm:$0xff]
        %v301 = vld [vmem:[%s163 + $0x3f8] sm:$0xff]
        %v302 = vld [vmem:[%s163 + $0x400] sm:$0xff]
        %v303 = vld [vmem:[%s163 + $0x408] sm:$0xff]
        %v304 = vld [vmem:[%s163 + $0x410] sm:$0xff]
        %v305 = vld [vmem:[%s163 + $0x418] sm:$0xff]
        %v306 = vld [vmem:[%s163 + $0x420] sm:$0xff]
        %v307 = vld [vmem:[%s163 + $0x428] sm:$0xff]
        %v308 = vld [vmem:[%s163 + $0x430] sm:$0xff]
        %v309 = vld [vmem:[%s163 + $0x438] sm:$0xff]
        %v310 = vld [vmem:[%s163 + $0x440] sm:$0xff]
        %v311 = vld [vmem:[%s163 + $0x448] sm:$0xff]
        %v312 = vld [vmem:[%s163 + $0x450] sm:$0xff]
        %v313 = vld [vmem:[%s163 + $0x458] sm:$0xff]
        %v314 = vld [vmem:[%s163 + $0x460] sm:$0xff]
        %v315 = vld [vmem:[%s163 + $0x468] sm:$0xff]
        %v316 = vld [vmem:[%s163 + $0x470] sm:$0xff]
        %v317 = vld [vmem:[%s163 + $0x478] sm:$0xff]
        %v318 = vld [vmem:[%s170] sm:$0xff]
        %v319 = vld [vmem:[%s170 + $0x8] sm:$0xff]
        %v320 = vld [vmem:[%s170 + $0x10] sm:$0xff]
        %v321 = vld [vmem:[%s170 + $0x18] sm:$0xff]
        %v322 = vld [vmem:[%s170 + $0x20] sm:$0xff]
        %v323 = vld [vmem:[%s170 + $0x28] sm:$0xff]
        %v324 = vld [vmem:[%s170 + $0x30] sm:$0xff]
        %v325 = vld [vmem:[%s170 + $0x38] sm:$0xff]
        %v326 = vld [vmem:[%s170 + $0x40] sm:$0xff]
        %v327 = vld [vmem:[%s170 + $0x48] sm:$0xff]
        %v328 = vld [vmem:[%s170 + $0x50] sm:$0xff]
        %v329 = vld [vmem:[%s170 + $0x58] sm:$0xff]
        %v330 = vld [vmem:[%s170 + $0x60] sm:$0xff]
        %v331 = vld [vmem:[%s170 + $0x68] sm:$0xff]
        %v332 = vld [vmem:[%s170 + $0x70] sm:$0xff]
        %v333 = vld [vmem:[%s170 + $0x78] sm:$0xff]
        %v334 = vld [vmem:[%s170 + $0x80] sm:$0xff]
        %v335 = vld [vmem:[%s170 + $0x88] sm:$0xff]
        %v336 = vld [vmem:[%s170 + $0x90] sm:$0xff]
        %v337 = vld [vmem:[%s170 + $0x98] sm:$0xff]
        %v338 = vld [vmem:[%s170 + $0xa0] sm:$0xff]
        %v339 = vld [vmem:[%s170 + $0xa8] sm:$0xff]
        %v340 = vld [vmem:[%s170 + $0xb0] sm:$0xff]
        %v341 = vld [vmem:[%s170 + $0xb8] sm:$0xff]
        %v342 = vld [vmem:[%s170 + $0xc0] sm:$0xff]
        %v343 = vld [vmem:[%s170 + $0xc8] sm:$0xff]
        %v344 = vld [vmem:[%s170 + $0xd0] sm:$0xff]
        %v345 = vld [vmem:[%s170 + $0xd8] sm:$0xff]
        %v346 = vld [vmem:[%s170 + $0xe0] sm:$0xff]
        %v347 = vld [vmem:[%s170 + $0xe8] sm:$0xff]
        %v348 = vld [vmem:[%s170 + $0xf0] sm:$0xff]
        %v349 = vld [vmem:[%s170 + $0xf8] sm:$0xff]
        %v350 = vld [vmem:[%s170 + $0x100] sm:$0xff]
        %v351 = vld [vmem:[%s170 + $0x108] sm:$0xff]
        %v352 = vld [vmem:[%s170 + $0x110] sm:$0xff]
        %v353 = vld [vmem:[%s170 + $0x118] sm:$0xff]
        %v354 = vld [vmem:[%s170 + $0x120] sm:$0xff]
        %v355 = vld [vmem:[%s170 + $0x128] sm:$0xff]
        %v356 = vld [vmem:[%s170 + $0x130] sm:$0xff]
        %v357 = vld [vmem:[%s170 + $0x138] sm:$0xff]
        %v358 = vld [vmem:[%s170 + $0x140] sm:$0xff]
        %v359 = vld [vmem:[%s170 + $0x148] sm:$0xff]
        %v360 = vld [vmem:[%s170 + $0x150] sm:$0xff]
        %v361 = vld [vmem:[%s170 + $0x158] sm:$0xff]
        %v362 = vld [vmem:[%s170 + $0x160] sm:$0xff]
        %v363 = vld [vmem:[%s170 + $0x168] sm:$0xff]
        %v364 = vld [vmem:[%s170 + $0x170] sm:$0xff]
        %v365 = vld [vmem:[%s170 + $0x178] sm:$0xff]
        %v366 = vld [vmem:[%s170 + $0x180] sm:$0xff]
        %v367 = vld [vmem:[%s170 + $0x188] sm:$0xff]
        %v368 = vld [vmem:[%s170 + $0x190] sm:$0xff]
        %v369 = vld [vmem:[%s170 + $0x198] sm:$0xff]
        %v370 = vld [vmem:[%s170 + $0x1a0] sm:$0xff]
        %v371 = vld [vmem:[%s170 + $0x1a8] sm:$0xff]
        %v372 = vld [vmem:[%s170 + $0x1b0] sm:$0xff]
        %v373 = vld [vmem:[%s170 + $0x1b8] sm:$0xff]
        %v374 = vld [vmem:[%s170 + $0x1c0] sm:$0xff]
        %v375 = vld [vmem:[%s170 + $0x1c8] sm:$0xff]
        %v376 = vld [vmem:[%s170 + $0x1d0] sm:$0xff]
        %v377 = vld [vmem:[%s170 + $0x1d8] sm:$0xff]
        %v378 = vld [vmem:[%s170 + $0x1e0] sm:$0xff]
        %v379 = vld [vmem:[%s170 + $0x1e8] sm:$0xff]
        %v380 = vld [vmem:[%s170 + $0x1f0] sm:$0xff]
        %v381 = vld [vmem:[%s170 + $0x1f8] sm:$0xff]
        %v382 = vld [vmem:[%s170 + $0x200] sm:$0xff]
        %v383 = vld [vmem:[%s170 + $0x208] sm:$0xff]
        %v384 = vld [vmem:[%s170 + $0x210] sm:$0xff]
        %v385 = vld [vmem:[%s170 + $0x218] sm:$0xff]
        %v386 = vld [vmem:[%s170 + $0x220] sm:$0xff]
        %v387 = vld [vmem:[%s170 + $0x228] sm:$0xff]
        %v388 = vld [vmem:[%s170 + $0x230] sm:$0xff]
        %v389 = vld [vmem:[%s170 + $0x238] sm:$0xff]
        %v390 = vpack.c.bf16 %v175, %v174
        %v391 = vpack.c.bf16 %v177, %v176
        %v392 = vpack.c.bf16 %v179, %v178
        %v393 = vpack.c.bf16 %v181, %v180
        %v394 = vpack.c.bf16 %v183, %v182
        %v395 = vpack.c.bf16 %v185, %v184
        %v396 = vpack.c.bf16 %v187, %v186
        %v397 = vpack.c.bf16 %v189, %v188
        %v398 = vpack.c.bf16 %v191, %v190
        %v399 = vpack.c.bf16 %v193, %v192
        %v400 = vpack.c.bf16 %v195, %v194
        %v401 = vpack.c.bf16 %v197, %v196
        %v402 = vpack.c.bf16 %v199, %v198
        %v403 = vpack.c.bf16 %v201, %v200
        %v404 = vpack.c.bf16 %v203, %v202
        %v405 = vpack.c.bf16 %v205, %v204
        %v406 = vpack.c.bf16 %v207, %v206
        %v407 = vpack.c.bf16 %v209, %v208
        %v408 = vpack.c.bf16 %v211, %v210
        %v409 = vpack.c.bf16 %v213, %v212
        %v410 = vpack.c.bf16 %v215, %v214
        %v411 = vpack.c.bf16 %v217, %v216
        %v412 = vpack.c.bf16 %v219, %v218
        %v413 = vpack.c.bf16 %v221, %v220
        %v414 = vpack.c.bf16 %v223, %v222
        %v415 = vpack.c.bf16 %v225, %v224
        %v416 = vpack.c.bf16 %v227, %v226
        %v417 = vpack.c.bf16 %v229, %v228
        %v418 = vpack.c.bf16 %v231, %v230
        %v419 = vpack.c.bf16 %v233, %v232
        %v420 = vpack.c.bf16 %v235, %v234
        %v421 = vpack.c.bf16 %v237, %v236
        %v422 = vpack.c.bf16 %v239, %v238
        %v423 = vpack.c.bf16 %v241, %v240
        %v424 = vpack.c.bf16 %v243, %v242
        %v425 = vpack.c.bf16 %v245, %v244
        %v426 = vpack.c.bf16 %v247, %v246
        %v427 = vpack.c.bf16 %v249, %v248
        %v428 = vpack.c.bf16 %v251, %v250
        %v429 = vpack.c.bf16 %v253, %v252
        %v430 = vpack.c.bf16 %v255, %v254
        %v431 = vpack.c.bf16 %v257, %v256
        %v432 = vpack.c.bf16 %v259, %v258
        %v433 = vpack.c.bf16 %v261, %v260
        %v434 = vpack.c.bf16 %v263, %v262
        %v435 = vpack.c.bf16 %v265, %v264
        %v436 = vpack.c.bf16 %v267, %v266
        %v437 = vpack.c.bf16 %v269, %v268
        %v438 = vpack.c.bf16 %v271, %v270
        %v439 = vpack.c.bf16 %v273, %v272
        %v440 = vpack.c.bf16 %v275, %v274
        %v441 = vpack.c.bf16 %v277, %v276
        %v442 = vpack.c.bf16 %v279, %v278
        %v443 = vpack.c.bf16 %v281, %v280
        %v444 = vpack.c.bf16 %v283, %v282
        %v445 = vpack.c.bf16 %v285, %v284
        %v446 = vpack.c.bf16 %v287, %v286
        %v447 = vpack.c.bf16 %v289, %v288
        %v448 = vpack.c.bf16 %v291, %v290
        %v449 = vpack.c.bf16 %v293, %v292
        %v450 = vpack.c.bf16 %v295, %v294
        %v451 = vpack.c.bf16 %v297, %v296
        %v452 = vpack.c.bf16 %v299, %v298
        %v453 = vpack.c.bf16 %v301, %v300
        %v454 = vpack.c.bf16 %v303, %v302
        %v455 = vpack.c.bf16 %v305, %v304
        %v456 = vpack.c.bf16 %v307, %v306
        %v457 = vpack.c.bf16 %v309, %v308
        %v458 = vpack.c.bf16 %v311, %v310
        %v459 = vpack.c.bf16 %v313, %v312
        %v460 = vpack.c.bf16 %v315, %v314
        %v461 = vpack.c.bf16 %v317, %v316
        %v462 = vpack.c.bf16 %v321, %v318
        %v463 = vpack.c.bf16 %v322, %v319
        %v464 = vpack.c.bf16 %v323, %v320
        %v465 = vpack.c.bf16 %v327, %v324
        %v466 = vpack.c.bf16 %v328, %v325
        %v467 = vpack.c.bf16 %v329, %v326
        %v468 = vpack.c.bf16 %v333, %v330
        %v469 = vpack.c.bf16 %v334, %v331
        %v470 = vpack.c.bf16 %v335, %v332
        %v471 = vpack.c.bf16 %v339, %v336
        %v472 = vpack.c.bf16 %v340, %v337
        %v473 = vpack.c.bf16 %v341, %v338
        %v474 = vpack.c.bf16 %v345, %v342
        %v475 = vpack.c.bf16 %v346, %v343
        %v476 = vpack.c.bf16 %v347, %v344
        %v477 = vpack.c.bf16 %v351, %v348
        %v478 = vpack.c.bf16 %v352, %v349
        %v479 = vpack.c.bf16 %v353, %v350
        %v480 = vpack.c.bf16 %v357, %v354
        %v481 = vpack.c.bf16 %v358, %v355
        %v482 = vpack.c.bf16 %v359, %v356
        %v483 = vpack.c.bf16 %v363, %v360
        %v484 = vpack.c.bf16 %v364, %v361
        %v485 = vpack.c.bf16 %v365, %v362
        %v486 = vpack.c.bf16 %v369, %v366
        %v487 = vpack.c.bf16 %v370, %v367
        %v488 = vpack.c.bf16 %v371, %v368
        %v489 = vpack.c.bf16 %v375, %v372
        %v490 = vpack.c.bf16 %v376, %v373
        %v491 = vpack.c.bf16 %v377, %v374
        %v492 = vpack.c.bf16 %v381, %v378
        %v493 = vpack.c.bf16 %v382, %v379
        %v494 = vpack.c.bf16 %v383, %v380
        %v495 = vpack.c.bf16 %v387, %v384
        %v496 = vpack.c.bf16 %v388, %v385
        %v497 = vpack.c.bf16 %v389, %v386
        %vm498 = vcmask 523264
        %v500 = vsel %vm498, %v390, 0
        %v503 = vsel %vm498, %v391, 0
        %v506 = vsel %vm498, %v392, 0
        %v509 = vsel %vm498, %v393, 0
        %v512 = vsel %vm498, %v394, 0
        %v515 = vsel %vm498, %v395, 0
        %v518 = vsel %vm498, %v396, 0
        %v521 = vsel %vm498, %v397, 0
        %v524 = vsel %vm498, %v398, 0
        %v527 = vsel %vm498, %v399, 0
        %v530 = vsel %vm498, %v400, 0
        %v533 = vsel %vm498, %v401, 0
        %v536 = vsel %vm498, %v402, 0
        %v539 = vsel %vm498, %v403, 0
        %v542 = vsel %vm498, %v404, 0
        %v545 = vsel %vm498, %v405, 0
        %v548 = vsel %vm498, %v406, 0
        %v551 = vsel %vm498, %v407, 0
        %v554 = vsel %vm498, %v408, 0
        %v557 = vsel %vm498, %v409, 0
        %v560 = vsel %vm498, %v410, 0
        %v563 = vsel %vm498, %v411, 0
        %v566 = vsel %vm498, %v412, 0
        %v569 = vsel %vm498, %v413, 0
        %571 = vmatprep.subr.bf16.mxu0 %v463
        %572 = vmatpush1.bf16.msra.mxu0 %v462
        %573 = vmatprep.subr.bf16.mxu0 %v466
        %574 = vmatpush1.bf16.msra.mxu0 %v465
        %575 = vmatprep.subr.bf16.mxu0 %v469
        %576 = vmatpush1.bf16.msra.mxu0 %v468
        %577 = vmatprep.subr.bf16.mxu0 %v472
        %578 = vmatpush1.bf16.msra.mxu0 %v471
        %579 = vmatprep.subr.bf16.mxu0 0
        %580 = vmatpush1.bf16.msra.mxu0 0
        %581 = vmatprep.subr.bf16.mxu0 0
        %582 = vmatpush1.bf16.msra.mxu0 0
        %583 = vmatprep.subr.bf16.mxu0 0
        %584 = vmatpush1.bf16.msra.mxu0 0
        %585 = vmatprep.subr.bf16.mxu0 0
        %586 = vmatpush1.bf16.msra.mxu0 0
        %587 = vmatprep.subr.bf16.mxu0 0
        %588 = vmatpush1.bf16.msra.mxu0 0
        %589 = vmatprep.subr.bf16.mxu0 0
        %590 = vmatpush1.bf16.msra.mxu0 0
        %591 = vmatprep.subr.bf16.mxu0 0
        %592 = vmatpush1.bf16.msra.mxu0 0
        %593 = vmatprep.subr.bf16.mxu0 0
        %594 = vmatpush1.bf16.msra.mxu0 0
        %595 = vmatprep.subr.bf16.mxu0 0
        %596 = vmatpush1.bf16.msra.mxu0 0
        %597 = vmatprep.subr.bf16.mxu0 0
        %598 = vmatpush1.bf16.msra.mxu0 0
        %599 = vmatprep.subr.bf16.mxu0 0
        %600 = vmatpush1.bf16.msra.mxu0 0
        %601 = vmatprep.subr.bf16.mxu0 0
        %602 = vmatpush1.bf16.msra.mxu0 0
        %603 = vmatprep.mubr.bf16.mxu0 0
        %604 = vmatmul.mubr.bf16.gmra.mrb[0].mxu0 %v500
        %v605 = vpop.f32.mrb[0].mxu0
        %v606 = vadd.f32 0.0, %v605
        %v607 = vpop.f32.mrb[0].mxu0
        %v608 = vadd.f32 0.0, %v607
        %v609 = vpop.f32.mrb[0].mxu0
        %v610 = vadd.f32 0.0, %v609
        %v611 = vpop.f32.mrb[0].mxu0
        %v612 = vadd.f32 0.0, %v611
        %613 = vmatprep.mubr.bf16.mxu0 0
        %614 = vmatmul.mubr.bf16.gmra.mrb[0].mxu0 %v503
        %v615 = vpop.f32.mrb[0].mxu0
        %v616 = vadd.f32 0.0, %v615
        %v617 = vpop.f32.mrb[0].mxu0
        %v618 = vadd.f32 0.0, %v617
        %v619 = vpop.f32.mrb[0].mxu0
        %v620 = vadd.f32 0.0, %v619
        %v621 = vpop.f32.mrb[0].mxu0
        %v622 = vadd.f32 0.0, %v621
        %623 = vmatprep.mubr.bf16.mxu0 0
        %624 = vmatmul.mubr.bf16.gmra.mrb[0].mxu0 %v506
        %v625 = vpop.f32.mrb[0].mxu0
        %v626 = vadd.f32 0.0, %v625
        %v627 = vpop.f32.mrb[0].mxu0
        %v628 = vadd.f32 0.0, %v627
        %v629 = vpop.f32.mrb[0].mxu0
        %v630 = vadd.f32 0.0, %v629
        %v631 = vpop.f32.mrb[0].mxu0
        %v632 = vadd.f32 0.0, %v631
        %633 = vmatprep.mubr.bf16.mxu0 0
        %634 = vmatmul.mubr.bf16.gmra.mrb[0].mxu0 %v509
        %v635 = vpop.f32.mrb[0].mxu0
        %v636 = vadd.f32 0.0, %v635
        %v637 = vpop.f32.mrb[0].mxu0
        %v638 = vadd.f32 0.0, %v637
        %v639 = vpop.f32.mrb[0].mxu0
        %v640 = vadd.f32 0.0, %v639
        %v641 = vpop.f32.mrb[0].mxu0
        %v642 = vadd.f32 0.0, %v641
        %643 = vmatprep.mubr.bf16.mxu0 0
        %644 = vmatmul.mubr.bf16.gmra.mrb[0].mxu0 %v512
        %v645 = vpop.f32.mrb[0].mxu0
        %v646 = vadd.f32 0.0, %v645
        %v647 = vpop.f32.mrb[0].mxu0
        %v648 = vadd.f32 0.0, %v647
        %v649 = vpop.f32.mrb[0].mxu0
        %v650 = vadd.f32 0.0, %v649
        %v651 = vpop.f32.mrb[0].mxu0
        %v652 = vadd.f32 0.0, %v651
        %653 = vmatprep.mubr.bf16.mxu0 0
        %654 = vmatmul.mubr.bf16.gmra.mrb[0].mxu0 %v515
        %v655 = vpop.f32.mrb[0].mxu0
        %v656 = vadd.f32 0.0, %v655
        %v657 = vpop.f32.mrb[0].mxu0
        %v658 = vadd.f32 0.0, %v657
        %v659 = vpop.f32.mrb[0].mxu0
        %v660 = vadd.f32 0.0, %v659
        %v661 = vpop.f32.mrb[0].mxu0
        %v662 = vadd.f32 0.0, %v661
        %663 = vmatprep.mubr.bf16.mxu0 0
        %664 = vmatmul.mubr.bf16.gmra.mrb[0].mxu0 %v518
        %v665 = vpop.f32.mrb[0].mxu0
        %v666 = vadd.f32 0.0, %v665
        %v667 = vpop.f32.mrb[0].mxu0
        %v668 = vadd.f32 0.0, %v667
        %v669 = vpop.f32.mrb[0].mxu0
        %v670 = vadd.f32 0.0, %v669
        %v671 = vpop.f32.mrb[0].mxu0
        %v672 = vadd.f32 0.0, %v671
        %673 = vmatprep.mubr.bf16.mxu0 0
        %674 = vmatmul.mubr.bf16.gmra.mrb[0].mxu0 %v521
        %v675 = vpop.f32.mrb[0].mxu0
        %v676 = vadd.f32 0.0, %v675
        %v677 = vpop.f32.mrb[0].mxu0
        %v678 = vadd.f32 0.0, %v677
        %v679 = vpop.f32.mrb[0].mxu0
        %v680 = vadd.f32 0.0, %v679
        %v681 = vpop.f32.mrb[0].mxu0
        %v682 = vadd.f32 0.0, %v681
        %683 = vmatprep.mubr.bf16.mxu0 0
        %684 = vmatmul.mubr.bf16.gmra.mrb[0].mxu0 %v524
        %v685 = vpop.f32.mrb[0].mxu0
        %v686 = vadd.f32 0.0, %v685
        %v687 = vpop.f32.mrb[0].mxu0
        %v688 = vadd.f32 0.0, %v687
        %v689 = vpop.f32.mrb[0].mxu0
        %v690 = vadd.f32 0.0, %v689
        %v691 = vpop.f32.mrb[0].mxu0
        %v692 = vadd.f32 0.0, %v691
        %693 = vmatprep.mubr.bf16.mxu0 0
        %694 = vmatmul.mubr.bf16.gmra.mrb[0].mxu0 %v527
        %v695 = vpop.f32.mrb[0].mxu0
        %v696 = vadd.f32 0.0, %v695
        %v697 = vpop.f32.mrb[0].mxu0
        %v698 = vadd.f32 0.0, %v697
        %v699 = vpop.f32.mrb[0].mxu0
        %v700 = vadd.f32 0.0, %v699
        %v701 = vpop.f32.mrb[0].mxu0
        %v702 = vadd.f32 0.0, %v701
        %703 = vmatprep.mubr.bf16.mxu0 0
        %704 = vmatmul.mubr.bf16.gmra.mrb[0].mxu0 %v530
        %v705 = vpop.f32.mrb[0].mxu0
        %v706 = vadd.f32 0.0, %v705
        %v707 = vpop.f32.mrb[0].mxu0
        %v708 = vadd.f32 0.0, %v707
        %v709 = vpop.f32.mrb[0].mxu0
        %v710 = vadd.f32 0.0, %v709
        %v711 = vpop.f32.mrb[0].mxu0
        %v712 = vadd.f32 0.0, %v711
        %713 = vmatprep.mubr.bf16.mxu0 0
        %714 = vmatmul.mubr.bf16.gmra.mrb[0].mxu0 %v533
        %v715 = vpop.f32.mrb[0].mxu0
        %v716 = vadd.f32 0.0, %v715
        %v717 = vpop.f32.mrb[0].mxu0
        %v718 = vadd.f32 0.0, %v717
        %v719 = vpop.f32.mrb[0].mxu0
        %v720 = vadd.f32 0.0, %v719
        %v721 = vpop.f32.mrb[0].mxu0
        %v722 = vadd.f32 0.0, %v721
        %723 = vmatprep.mubr.bf16.mxu0 0
        %724 = vmatmul.mubr.bf16.gmra.mrb[0].mxu0 %v536
        %v725 = vpop.f32.mrb[0].mxu0
        %v726 = vadd.f32 0.0, %v725
        %v727 = vpop.f32.mrb[0].mxu0
        %v728 = vadd.f32 0.0, %v727
        %v729 = vpop.f32.mrb[0].mxu0
        %v730 = vadd.f32 0.0, %v729
        %v731 = vpop.f32.mrb[0].mxu0
        %v732 = vadd.f32 0.0, %v731
        %733 = vmatprep.mubr.bf16.mxu0 0
        %734 = vmatmul.mubr.bf16.gmra.mrb[0].mxu0 %v539
        %v735 = vpop.f32.mrb[0].mxu0
        %v736 = vadd.f32 0.0, %v735
        %v737 = vpop.f32.mrb[0].mxu0
        %v738 = vadd.f32 0.0, %v737
        %v739 = vpop.f32.mrb[0].mxu0
        %v740 = vadd.f32 0.0, %v739
        %v741 = vpop.f32.mrb[0].mxu0
        %v742 = vadd.f32 0.0, %v741
        %743 = vmatprep.mubr.bf16.mxu0 0
        %744 = vmatmul.mubr.bf16.gmra.mrb[0].mxu0 %v542
        %v745 = vpop.f32.mrb[0].mxu0
        %v746 = vadd.f32 0.0, %v745
        %v747 = vpop.f32.mrb[0].mxu0
        %v748 = vadd.f32 0.0, %v747
        %v749 = vpop.f32.mrb[0].mxu0
        %v750 = vadd.f32 0.0, %v749
        %v751 = vpop.f32.mrb[0].mxu0
        %v752 = vadd.f32 0.0, %v751
        %753 = vmatprep.mubr.bf16.mxu0 0
        %754 = vmatmul.mubr.bf16.gmra.mrb[0].mxu0 %v545
        %v755 = vpop.f32.mrb[0].mxu0
        %v756 = vadd.f32 0.0, %v755
        %v757 = vpop.f32.mrb[0].mxu0
        %v758 = vadd.f32 0.0, %v757
        %v759 = vpop.f32.mrb[0].mxu0
        %v760 = vadd.f32 0.0, %v759
        %v761 = vpop.f32.mrb[0].mxu0
        %v762 = vadd.f32 0.0, %v761
        %763 = vmatprep.mubr.bf16.mxu0 0
        %764 = vmatmul.mubr.bf16.gmra.mrb[0].mxu0 %v548
        %v765 = vpop.f32.mrb[0].mxu0
        %v766 = vadd.f32 0.0, %v765
        %v767 = vpop.f32.mrb[0].mxu0
        %v768 = vadd.f32 0.0, %v767
        %v769 = vpop.f32.mrb[0].mxu0
        %v770 = vadd.f32 0.0, %v769
        %v771 = vpop.f32.mrb[0].mxu0
        %v772 = vadd.f32 0.0, %v771
        %773 = vmatprep.mubr.bf16.mxu0 0
        %774 = vmatmul.mubr.bf16.gmra.mrb[0].mxu0 %v551
        %v775 = vpop.f32.mrb[0].mxu0
        %v776 = vadd.f32 0.0, %v775
        %v777 = vpop.f32.mrb[0].mxu0
        %v778 = vadd.f32 0.0, %v777
        %v779 = vpop.f32.mrb[0].mxu0
        %v780 = vadd.f32 0.0, %v779
        %v781 = vpop.f32.mrb[0].mxu0
        %v782 = vadd.f32 0.0, %v781
        %783 = vmatprep.mubr.bf16.mxu0 0
        %784 = vmatmul.mubr.bf16.gmra.mrb[0].mxu0 %v554
        %v785 = vpop.f32.mrb[0].mxu0
        %v786 = vadd.f32 0.0, %v785
        %v787 = vpop.f32.mrb[0].mxu0
        %v788 = vadd.f32 0.0, %v787
        %v789 = vpop.f32.mrb[0].mxu0
        %v790 = vadd.f32 0.0, %v789
        %v791 = vpop.f32.mrb[0].mxu0
        %v792 = vadd.f32 0.0, %v791
        %793 = vmatprep.mubr.bf16.mxu0 0
        %794 = vmatmul.mubr.bf16.gmra.mrb[0].mxu0 %v557
        %v795 = vpop.f32.mrb[0].mxu0
        %v796 = vadd.f32 0.0, %v795
        %v797 = vpop.f32.mrb[0].mxu0
        %v798 = vadd.f32 0.0, %v797
        %v799 = vpop.f32.mrb[0].mxu0
        %v800 = vadd.f32 0.0, %v799
        %v801 = vpop.f32.mrb[0].mxu0
        %v802 = vadd.f32 0.0, %v801
        %803 = vmatprep.mubr.bf16.mxu0 0
        %804 = vmatmul.mubr.bf16.gmra.mrb[0].mxu0 %v560
        %v805 = vpop.f32.mrb[0].mxu0
        %v806 = vadd.f32 0.0, %v805
        %v807 = vpop.f32.mrb[0].mxu0
        %v808 = vadd.f32 0.0, %v807
        %v809 = vpop.f32.mrb[0].mxu0
        %v810 = vadd.f32 0.0, %v809
        %v811 = vpop.f32.mrb[0].mxu0
        %v812 = vadd.f32 0.0, %v811
        %813 = vmatprep.mubr.bf16.mxu0 0
        %814 = vmatmul.mubr.bf16.gmra.mrb[0].mxu0 %v563
        %v815 = vpop.f32.mrb[0].mxu0
        %v816 = vadd.f32 0.0, %v815
        %v817 = vpop.f32.mrb[0].mxu0
        %v818 = vadd.f32 0.0, %v817
        %v819 = vpop.f32.mrb[0].mxu0
        %v820 = vadd.f32 0.0, %v819
        %v821 = vpop.f32.mrb[0].mxu0
        %v822 = vadd.f32 0.0, %v821
        %823 = vmatprep.mubr.bf16.mxu0 0
        %824 = vmatmul.mubr.bf16.gmra.mrb[0].mxu0 %v566
        %v825 = vpop.f32.mrb[0].mxu0
        %v826 = vadd.f32 0.0, %v825
        %v827 = vpop.f32.mrb[0].mxu0
        %v828 = vadd.f32 0.0, %v827
        %v829 = vpop.f32.mrb[0].mxu0
        %v830 = vadd.f32 0.0, %v829
        %v831 = vpop.f32.mrb[0].mxu0
        %v832 = vadd.f32 0.0, %v831
        %833 = vmatprep.mubr.bf16.mxu0 0
        %834 = vmatmul.mubr.bf16.gmra.mrb[0].mxu0 %v569
        %v835 = vpop.f32.mrb[0].mxu0
        %v836 = vadd.f32 0.0, %v835
        %v837 = vpop.f32.mrb[0].mxu0
        %v838 = vadd.f32 0.0, %v837
        %v839 = vpop.f32.mrb[0].mxu0
        %v840 = vadd.f32 0.0, %v839
        %v841 = vpop.f32.mrb[0].mxu0
        %v842 = vadd.f32 0.0, %v841
        %843 = vdwg.mxu0
        %844 = vmatprep.subr.bf16.mxu0 0
        %845 = vmatpush1.bf16.msra.mxu0 %v464
        %846 = vmatprep.subr.bf16.mxu0 0
        %847 = vmatpush1.bf16.msra.mxu0 %v467
        %848 = vmatprep.subr.bf16.mxu0 0
        %849 = vmatpush1.bf16.msra.mxu0 %v470
        %850 = vmatprep.subr.bf16.mxu0 0
        %851 = vmatpush1.bf16.msra.mxu0 %v473
        %852 = vmatprep.subr.bf16.mxu0 0
        %853 = vmatpush1.bf16.msra.mxu0 0
        %854 = vmatprep.subr.bf16.mxu0 0
        %855 = vmatpush1.bf16.msra.mxu0 0
        %856 = vmatprep.subr.bf16.mxu0 0
        %857 = vmatpush1.bf16.msra.mxu0 0
        %858 = vmatprep.subr.bf16.mxu0 0
        %859 = vmatpush1.bf16.msra.mxu0 0
        %860 = vmatprep.subr.bf16.mxu0 0
        %861 = vmatpush1.bf16.msra.mxu0 0
        %862 = vmatprep.subr.bf16.mxu0 0
        %863 = vmatpush1.bf16.msra.mxu0 0
        %864 = vmatprep.subr.bf16.mxu0 0
        %865 = vmatpush1.bf16.msra.mxu0 0
        %866 = vmatprep.subr.bf16.mxu0 0
        %867 = vmatpush1.bf16.msra.mxu0 0
        %868 = vmatprep.subr.bf16.mxu0 0
        %869 = vmatpush1.bf16.msra.mxu0 0
        %870 = vmatprep.subr.bf16.mxu0 0
        %871 = vmatpush1.bf16.msra.mxu0 0
        %872 = vmatprep.subr.bf16.mxu0 0
        %873 = vmatpush1.bf16.msra.mxu0 0
        %874 = vmatprep.subr.bf16.mxu0 0
        %875 = vmatpush1.bf16.msra.mxu0 0
        %876 = vmatprep.mubr.bf16.mxu0 0
        %877 = vmatmul.mubr.bf16.gmra.mrb[0].mxu0 %v500
        %v878 = vpop.f32.mrb[0].mxu0
        %v879 = vadd.f32 0.0, %v878
        %v880 = vpop.f32.mrb[0].mxu0
        %v881 = vpop.f32.mrb[0].mxu0
        %v882 = vadd.f32 0.0, %v881
        %v883 = vpop.f32.mrb[0].mxu0
        %884 = vmatprep.mubr.bf16.mxu0 0
        %885 = vmatmul.mubr.bf16.gmra.mrb[0].mxu0 %v503
        %v886 = vpop.f32.mrb[0].mxu0
        %v887 = vadd.f32 0.0, %v886
        %v888 = vpop.f32.mrb[0].mxu0
        %v889 = vpop.f32.mrb[0].mxu0
        %v890 = vadd.f32 0.0, %v889
        %v891 = vpop.f32.mrb[0].mxu0
        %892 = vmatprep.mubr.bf16.mxu0 0
        %893 = vmatmul.mubr.bf16.gmra.mrb[0].mxu0 %v506
        %v894 = vpop.f32.mrb[0].mxu0
        %v895 = vadd.f32 0.0, %v894
        %v896 = vpop.f32.mrb[0].mxu0
        %v897 = vpop.f32.mrb[0].mxu0
        %v898 = vadd.f32 0.0, %v897
        %v899 = vpop.f32.mrb[0].mxu0
        %900 = vmatprep.mubr.bf16.mxu0 0
        %901 = vmatmul.mubr.bf16.gmra.mrb[0].mxu0 %v509
        %v902 = vpop.f32.mrb[0].mxu0
        %v903 = vadd.f32 0.0, %v902
        %v904 = vpop.f32.mrb[0].mxu0
        %v905 = vpop.f32.mrb[0].mxu0
        %v906 = vadd.f32 0.0, %v905
        %v907 = vpop.f32.mrb[0].mxu0
        %908 = vmatprep.mubr.bf16.mxu0 0
        %909 = vmatmul.mubr.bf16.gmra.mrb[0].mxu0 %v512
        %v910 = vpop.f32.mrb[0].mxu0
        %v911 = vadd.f32 0.0, %v910
        %v912 = vpop.f32.mrb[0].mxu0
        %v913 = vpop.f32.mrb[0].mxu0
        %v914 = vadd.f32 0.0, %v913
        %v915 = vpop.f32.mrb[0].mxu0
        %916 = vmatprep.mubr.bf16.mxu0 0
        %917 = vmatmul.mubr.bf16.gmra.mrb[0].mxu0 %v515
        %v918 = vpop.f32.mrb[0].mxu0
        %v919 = vadd.f32 0.0, %v918
        %v920 = vpop.f32.mrb[0].mxu0
        %v921 = vpop.f32.mrb[0].mxu0
        %v922 = vadd.f32 0.0, %v921
        %v923 = vpop.f32.mrb[0].mxu0
        %924 = vmatprep.mubr.bf16.mxu0 0
        %925 = vmatmul.mubr.bf16.gmra.mrb[0].mxu0 %v518
        %v926 = vpop.f32.mrb[0].mxu0
        %v927 = vadd.f32 0.0, %v926
        %v928 = vpop.f32.mrb[0].mxu0
        %v929 = vpop.f32.mrb[0].mxu0
        %v930 = vadd.f32 0.0, %v929
        %v931 = vpop.f32.mrb[0].mxu0
        %932 = vmatprep.mubr.bf16.mxu0 0
        %933 = vmatmul.mubr.bf16.gmra.mrb[0].mxu0 %v521
        %v934 = vpop.f32.mrb[0].mxu0
        %v935 = vadd.f32 0.0, %v934
        %v936 = vpop.f32.mrb[0].mxu0
        %v937 = vpop.f32.mrb[0].mxu0
        %v938 = vadd.f32 0.0, %v937
        %v939 = vpop.f32.mrb[0].mxu0
        %940 = vmatprep.mubr.bf16.mxu0 0
        %941 = vmatmul.mubr.bf16.gmra.mrb[0].mxu0 %v524
        %v942 = vpop.f32.mrb[0].mxu0
        %v943 = vadd.f32 0.0, %v942
        %v944 = vpop.f32.mrb[0].mxu0
        %v945 = vpop.f32.mrb[0].mxu0
        %v946 = vadd.f32 0.0, %v945
        %v947 = vpop.f32.mrb[0].mxu0
        %948 = vmatprep.mubr.bf16.mxu0 0
        %949 = vmatmul.mubr.bf16.gmra.mrb[0].mxu0 %v527
        %v950 = vpop.f32.mrb[0].mxu0
        %v951 = vadd.f32 0.0, %v950
        %v952 = vpop.f32.mrb[0].mxu0
        %v953 = vpop.f32.mrb[0].mxu0
        %v954 = vadd.f32 0.0, %v953
        %v955 = vpop.f32.mrb[0].mxu0
        %956 = vmatprep.mubr.bf16.mxu0 0
        %957 = vmatmul.mubr.bf16.gmra.mrb[0].mxu0 %v530
        %v958 = vpop.f32.mrb[0].mxu0
        %v959 = vadd.f32 0.0, %v958
        %v960 = vpop.f32.mrb[0].mxu0
        %v961 = vpop.f32.mrb[0].mxu0
        %v962 = vadd.f32 0.0, %v961
        %v963 = vpop.f32.mrb[0].mxu0
        %964 = vmatprep.mubr.bf16.mxu0 0
        %965 = vmatmul.mubr.bf16.gmra.mrb[0].mxu0 %v533
        %v966 = vpop.f32.mrb[0].mxu0
        %v967 = vadd.f32 0.0, %v966
        %v968 = vpop.f32.mrb[0].mxu0
        %v969 = vpop.f32.mrb[0].mxu0
        %v970 = vadd.f32 0.0, %v969
        %v971 = vpop.f32.mrb[0].mxu0
        %972 = vmatprep.mubr.bf16.mxu0 0
        %973 = vmatmul.mubr.bf16.gmra.mrb[0].mxu0 %v536
        %v974 = vpop.f32.mrb[0].mxu0
        %v975 = vadd.f32 0.0, %v974
        %v976 = vpop.f32.mrb[0].mxu0
        %v977 = vpop.f32.mrb[0].mxu0
        %v978 = vadd.f32 0.0, %v977
        %v979 = vpop.f32.mrb[0].mxu0
        %980 = vmatprep.mubr.bf16.mxu0 0
        %981 = vmatmul.mubr.bf16.gmra.mrb[0].mxu0 %v539
        %v982 = vpop.f32.mrb[0].mxu0
        %v983 = vadd.f32 0.0, %v982
        %v984 = vpop.f32.mrb[0].mxu0
        %v985 = vpop.f32.mrb[0].mxu0
        %v986 = vadd.f32 0.0, %v985
        %v987 = vpop.f32.mrb[0].mxu0
        %988 = vmatprep.mubr.bf16.mxu0 0
        %989 = vmatmul.mubr.bf16.gmra.mrb[0].mxu0 %v542
        %v990 = vpop.f32.mrb[0].mxu0
        %v991 = vadd.f32 0.0, %v990
        %v992 = vpop.f32.mrb[0].mxu0
        %v993 = vpop.f32.mrb[0].mxu0
        %v994 = vadd.f32 0.0, %v993
        %v995 = vpop.f32.mrb[0].mxu0
        %996 = vmatprep.mubr.bf16.mxu0 0
        %997 = vmatmul.mubr.bf16.gmra.mrb[0].mxu0 %v545
        %v998 = vpop.f32.mrb[0].mxu0
        %v999 = vadd.f32 0.0, %v998
        %v1000 = vpop.f32.mrb[0].mxu0
        %v1001 = vpop.f32.mrb[0].mxu0
        %v1002 = vadd.f32 0.0, %v1001
        %v1003 = vpop.f32.mrb[0].mxu0
        %1004 = vmatprep.mubr.bf16.mxu0 0
        %1005 = vmatmul.mubr.bf16.gmra.mrb[0].mxu0 %v548
        %v1006 = vpop.f32.mrb[0].mxu0
        %v1007 = vadd.f32 0.0, %v1006
        %v1008 = vpop.f32.mrb[0].mxu0
        %v1009 = vpop.f32.mrb[0].mxu0
        %v1010 = vadd.f32 0.0, %v1009
        %v1011 = vpop.f32.mrb[0].mxu0
        %1012 = vmatprep.mubr.bf16.mxu0 0
        %1013 = vmatmul.mubr.bf16.gmra.mrb[0].mxu0 %v551
        %v1014 = vpop.f32.mrb[0].mxu0
        %v1015 = vadd.f32 0.0, %v1014
        %v1016 = vpop.f32.mrb[0].mxu0
        %v1017 = vpop.f32.mrb[0].mxu0
        %v1018 = vadd.f32 0.0, %v1017
        %v1019 = vpop.f32.mrb[0].mxu0
        %1020 = vmatprep.mubr.bf16.mxu0 0
        %1021 = vmatmul.mubr.bf16.gmra.mrb[0].mxu0 %v554
        %v1022 = vpop.f32.mrb[0].mxu0
        %v1023 = vadd.f32 0.0, %v1022
        %v1024 = vpop.f32.mrb[0].mxu0
        %v1025 = vpop.f32.mrb[0].mxu0
        %v1026 = vadd.f32 0.0, %v1025
        %v1027 = vpop.f32.mrb[0].mxu0
        %1028 = vmatprep.mubr.bf16.mxu0 0
        %1029 = vmatmul.mubr.bf16.gmra.mrb[0].mxu0 %v557
        %v1030 = vpop.f32.mrb[0].mxu0
        %v1031 = vadd.f32 0.0, %v1030
        %v1032 = vpop.f32.mrb[0].mxu0
        %v1033 = vpop.f32.mrb[0].mxu0
        %v1034 = vadd.f32 0.0, %v1033
        %v1035 = vpop.f32.mrb[0].mxu0
        %1036 = vmatprep.mubr.bf16.mxu0 0
        %1037 = vmatmul.mubr.bf16.gmra.mrb[0].mxu0 %v560
        %v1038 = vpop.f32.mrb[0].mxu0
        %v1039 = vadd.f32 0.0, %v1038
        %v1040 = vpop.f32.mrb[0].mxu0
        %v1041 = vpop.f32.mrb[0].mxu0
        %v1042 = vadd.f32 0.0, %v1041
        %v1043 = vpop.f32.mrb[0].mxu0
        %1044 = vmatprep.mubr.bf16.mxu0 0
        %1045 = vmatmul.mubr.bf16.gmra.mrb[0].mxu0 %v563
        %v1046 = vpop.f32.mrb[0].mxu0
        %v1047 = vadd.f32 0.0, %v1046
        %v1048 = vpop.f32.mrb[0].mxu0
        %v1049 = vpop.f32.mrb[0].mxu0
        %v1050 = vadd.f32 0.0, %v1049
        %v1051 = vpop.f32.mrb[0].mxu0
        %1052 = vmatprep.mubr.bf16.mxu0 0
        %1053 = vmatmul.mubr.bf16.gmra.mrb[0].mxu0 %v566
        %v1054 = vpop.f32.mrb[0].mxu0
        %v1055 = vadd.f32 0.0, %v1054
        %v1056 = vpop.f32.mrb[0].mxu0
        %v1057 = vpop.f32.mrb[0].mxu0
        %v1058 = vadd.f32 0.0, %v1057
        %v1059 = vpop.f32.mrb[0].mxu0
        %1060 = vmatprep.mubr.bf16.mxu0 0
        %1061 = vmatmul.mubr.bf16.gmra.mrb[0].mxu0 %v569
        %v1062 = vpop.f32.mrb[0].mxu0
        %v1063 = vadd.f32 0.0, %v1062
        %v1064 = vpop.f32.mrb[0].mxu0
        %v1065 = vpop.f32.mrb[0].mxu0
        %v1066 = vadd.f32 0.0, %v1065
        %v1067 = vpop.f32.mrb[0].mxu0
        %1068 = vdwg.mxu0
        %v1070 = vsel %vm498, %v414, 0
        %v1073 = vsel %vm498, %v415, 0
        %v1076 = vsel %vm498, %v416, 0
        %v1079 = vsel %vm498, %v417, 0
        %v1082 = vsel %vm498, %v418, 0
        %v1085 = vsel %vm498, %v419, 0
        %v1088 = vsel %vm498, %v420, 0
        %v1091 = vsel %vm498, %v421, 0
        %v1094 = vsel %vm498, %v422, 0
        %v1097 = vsel %vm498, %v423, 0
        %v1100 = vsel %vm498, %v424, 0
        %v1103 = vsel %vm498, %v425, 0
        %v1106 = vsel %vm498, %v426, 0
        %v1109 = vsel %vm498, %v427, 0
        %v1112 = vsel %vm498, %v428, 0
        %v1115 = vsel %vm498, %v429, 0
        %v1118 = vsel %vm498, %v430, 0
        %v1121 = vsel %vm498, %v431, 0
        %v1124 = vsel %vm498, %v432, 0
        %v1127 = vsel %vm498, %v433, 0
        %v1130 = vsel %vm498, %v434, 0
        %v1133 = vsel %vm498, %v435, 0
        %v1136 = vsel %vm498, %v436, 0
        %v1139 = vsel %vm498, %v437, 0
        %1141 = vmatprep.subr.bf16.mxu0 %v475
        %1142 = vmatpush1.bf16.msra.mxu0 %v474
        %1143 = vmatprep.subr.bf16.mxu0 %v478
        %1144 = vmatpush1.bf16.msra.mxu0 %v477
        %1145 = vmatprep.subr.bf16.mxu0 %v481
        %1146 = vmatpush1.bf16.msra.mxu0 %v480
        %1147 = vmatprep.subr.bf16.mxu0 %v484
        %1148 = vmatpush1.bf16.msra.mxu0 %v483
        %1149 = vmatprep.subr.bf16.mxu0 0
        %1150 = vmatpush1.bf16.msra.mxu0 0
        %1151 = vmatprep.subr.bf16.mxu0 0
        %1152 = vmatpush1.bf16.msra.mxu0 0
        %1153 = vmatprep.subr.bf16.mxu0 0
        %1154 = vmatpush1.bf16.msra.mxu0 0
        %1155 = vmatprep.subr.bf16.mxu0 0
        %1156 = vmatpush1.bf16.msra.mxu0 0
        %1157 = vmatprep.subr.bf16.mxu0 0
        %1158 = vmatpush1.bf16.msra.mxu0 0
        %1159 = vmatprep.subr.bf16.mxu0 0
        %1160 = vmatpush1.bf16.msra.mxu0 0
        %1161 = vmatprep.subr.bf16.mxu0 0
        %1162 = vmatpush1.bf16.msra.mxu0 0
        %1163 = vmatprep.subr.bf16.mxu0 0
        %1164 = vmatpush1.bf16.msra.mxu0 0
        %1165 = vmatprep.subr.bf16.mxu0 0
        %1166 = vmatpush1.bf16.msra.mxu0 0
        %1167 = vmatprep.subr.bf16.mxu0 0
        %1168 = vmatpush1.bf16.msra.mxu0 0
        %1169 = vmatprep.subr.bf16.mxu0 0
        %1170 = vmatpush1.bf16.msra.mxu0 0
        %1171 = vmatprep.subr.bf16.mxu0 0
        %1172 = vmatpush1.bf16.msra.mxu0 0
        %1173 = vmatprep.mubr.bf16.mxu0 0
        %1174 = vmatmul.mubr.bf16.gmra.mrb[0].mxu0 %v1070
        %v1175 = vpop.f32.mrb[0].mxu0
        %v1176 = vadd.f32 0.0, %v1175
        %v1177 = vpop.f32.mrb[0].mxu0
        %v1178 = vadd.f32 0.0, %v1177
        %v1179 = vpop.f32.mrb[0].mxu0
        %v1180 = vadd.f32 0.0, %v1179
        %v1181 = vpop.f32.mrb[0].mxu0
        %v1182 = vadd.f32 0.0, %v1181
        %1183 = vmatprep.mubr.bf16.mxu0 0
        %1184 = vmatmul.mubr.bf16.gmra.mrb[0].mxu0 %v1073
        %v1185 = vpop.f32.mrb[0].mxu0
        %v1186 = vadd.f32 0.0, %v1185
        %v1187 = vpop.f32.mrb[0].mxu0
        %v1188 = vadd.f32 0.0, %v1187
        %v1189 = vpop.f32.mrb[0].mxu0
        %v1190 = vadd.f32 0.0, %v1189
        %v1191 = vpop.f32.mrb[0].mxu0
        %v1192 = vadd.f32 0.0, %v1191
        %1193 = vmatprep.mubr.bf16.mxu0 0
        %1194 = vmatmul.mubr.bf16.gmra.mrb[0].mxu0 %v1076
        %v1195 = vpop.f32.mrb[0].mxu0
        %v1196 = vadd.f32 0.0, %v1195
        %v1197 = vpop.f32.mrb[0].mxu0
        %v1198 = vadd.f32 0.0, %v1197
        %v1199 = vpop.f32.mrb[0].mxu0
        %v1200 = vadd.f32 0.0, %v1199
        %v1201 = vpop.f32.mrb[0].mxu0
        %v1202 = vadd.f32 0.0, %v1201
        %1203 = vmatprep.mubr.bf16.mxu0 0
        %1204 = vmatmul.mubr.bf16.gmra.mrb[0].mxu0 %v1079
        %v1205 = vpop.f32.mrb[0].mxu0
        %v1206 = vadd.f32 0.0, %v1205
        %v1207 = vpop.f32.mrb[0].mxu0
        %v1208 = vadd.f32 0.0, %v1207
        %v1209 = vpop.f32.mrb[0].mxu0
        %v1210 = vadd.f32 0.0, %v1209
        %v1211 = vpop.f32.mrb[0].mxu0
        %v1212 = vadd.f32 0.0, %v1211
        %1213 = vmatprep.mubr.bf16.mxu0 0
        %1214 = vmatmul.mubr.bf16.gmra.mrb[0].mxu0 %v1082
        %v1215 = vpop.f32.mrb[0].mxu0
        %v1216 = vadd.f32 0.0, %v1215
        %v1217 = vpop.f32.mrb[0].mxu0
        %v1218 = vadd.f32 0.0, %v1217
        %v1219 = vpop.f32.mrb[0].mxu0
        %v1220 = vadd.f32 0.0, %v1219
        %v1221 = vpop.f32.mrb[0].mxu0
        %v1222 = vadd.f32 0.0, %v1221
        %1223 = vmatprep.mubr.bf16.mxu0 0
        %1224 = vmatmul.mubr.bf16.gmra.mrb[0].mxu0 %v1085
        %v1225 = vpop.f32.mrb[0].mxu0
        %v1226 = vadd.f32 0.0, %v1225
        %v1227 = vpop.f32.mrb[0].mxu0
        %v1228 = vadd.f32 0.0, %v1227
        %v1229 = vpop.f32.mrb[0].mxu0
        %v1230 = vadd.f32 0.0, %v1229
        %v1231 = vpop.f32.mrb[0].mxu0
        %v1232 = vadd.f32 0.0, %v1231
        %1233 = vmatprep.mubr.bf16.mxu0 0
        %1234 = vmatmul.mubr.bf16.gmra.mrb[0].mxu0 %v1088
        %v1235 = vpop.f32.mrb[0].mxu0
        %v1236 = vadd.f32 0.0, %v1235
        %v1237 = vpop.f32.mrb[0].mxu0
        %v1238 = vadd.f32 0.0, %v1237
        %v1239 = vpop.f32.mrb[0].mxu0
        %v1240 = vadd.f32 0.0, %v1239
        %v1241 = vpop.f32.mrb[0].mxu0
        %v1242 = vadd.f32 0.0, %v1241
        %1243 = vmatprep.mubr.bf16.mxu0 0
        %1244 = vmatmul.mubr.bf16.gmra.mrb[0].mxu0 %v1091
        %v1245 = vpop.f32.mrb[0].mxu0
        %v1246 = vadd.f32 0.0, %v1245
        %v1247 = vpop.f32.mrb[0].mxu0
        %v1248 = vadd.f32 0.0, %v1247
        %v1249 = vpop.f32.mrb[0].mxu0
        %v1250 = vadd.f32 0.0, %v1249
        %v1251 = vpop.f32.mrb[0].mxu0
        %v1252 = vadd.f32 0.0, %v1251
        %1253 = vmatprep.mubr.bf16.mxu0 0
        %1254 = vmatmul.mubr.bf16.gmra.mrb[0].mxu0 %v1094
        %v1255 = vpop.f32.mrb[0].mxu0
        %v1256 = vadd.f32 0.0, %v1255
        %v1257 = vpop.f32.mrb[0].mxu0
        %v1258 = vadd.f32 0.0, %v1257
        %v1259 = vpop.f32.mrb[0].mxu0
        %v1260 = vadd.f32 0.0, %v1259
        %v1261 = vpop.f32.mrb[0].mxu0
        %v1262 = vadd.f32 0.0, %v1261
        %1263 = vmatprep.mubr.bf16.mxu0 0
        %1264 = vmatmul.mubr.bf16.gmra.mrb[0].mxu0 %v1097
        %v1265 = vpop.f32.mrb[0].mxu0
        %v1266 = vadd.f32 0.0, %v1265
        %v1267 = vpop.f32.mrb[0].mxu0
        %v1268 = vadd.f32 0.0, %v1267
        %v1269 = vpop.f32.mrb[0].mxu0
        %v1270 = vadd.f32 0.0, %v1269
        %v1271 = vpop.f32.mrb[0].mxu0
        %v1272 = vadd.f32 0.0, %v1271
        %1273 = vmatprep.mubr.bf16.mxu0 0
        %1274 = vmatmul.mubr.bf16.gmra.mrb[0].mxu0 %v1100
        %v1275 = vpop.f32.mrb[0].mxu0
        %v1276 = vadd.f32 0.0, %v1275
        %v1277 = vpop.f32.mrb[0].mxu0
        %v1278 = vadd.f32 0.0, %v1277
        %v1279 = vpop.f32.mrb[0].mxu0
        %v1280 = vadd.f32 0.0, %v1279
        %v1281 = vpop.f32.mrb[0].mxu0
        %v1282 = vadd.f32 0.0, %v1281
        %1283 = vmatprep.mubr.bf16.mxu0 0
        %1284 = vmatmul.mubr.bf16.gmra.mrb[0].mxu0 %v1103
        %v1285 = vpop.f32.mrb[0].mxu0
        %v1286 = vadd.f32 0.0, %v1285
        %v1287 = vpop.f32.mrb[0].mxu0
        %v1288 = vadd.f32 0.0, %v1287
        %v1289 = vpop.f32.mrb[0].mxu0
        %v1290 = vadd.f32 0.0, %v1289
        %v1291 = vpop.f32.mrb[0].mxu0
        %v1292 = vadd.f32 0.0, %v1291
        %1293 = vmatprep.mubr.bf16.mxu0 0
        %1294 = vmatmul.mubr.bf16.gmra.mrb[0].mxu0 %v1106
        %v1295 = vpop.f32.mrb[0].mxu0
        %v1296 = vadd.f32 0.0, %v1295
        %v1297 = vpop.f32.mrb[0].mxu0
        %v1298 = vadd.f32 0.0, %v1297
        %v1299 = vpop.f32.mrb[0].mxu0
        %v1300 = vadd.f32 0.0, %v1299
        %v1301 = vpop.f32.mrb[0].mxu0
        %v1302 = vadd.f32 0.0, %v1301
        %1303 = vmatprep.mubr.bf16.mxu0 0
        %1304 = vmatmul.mubr.bf16.gmra.mrb[0].mxu0 %v1109
        %v1305 = vpop.f32.mrb[0].mxu0
        %v1306 = vadd.f32 0.0, %v1305
        %v1307 = vpop.f32.mrb[0].mxu0
        %v1308 = vadd.f32 0.0, %v1307
        %v1309 = vpop.f32.mrb[0].mxu0
        %v1310 = vadd.f32 0.0, %v1309
        %v1311 = vpop.f32.mrb[0].mxu0
        %v1312 = vadd.f32 0.0, %v1311
        %1313 = vmatprep.mubr.bf16.mxu0 0
        %1314 = vmatmul.mubr.bf16.gmra.mrb[0].mxu0 %v1112
        %v1315 = vpop.f32.mrb[0].mxu0
        %v1316 = vadd.f32 0.0, %v1315
        %v1317 = vpop.f32.mrb[0].mxu0
        %v1318 = vadd.f32 0.0, %v1317
        %v1319 = vpop.f32.mrb[0].mxu0
        %v1320 = vadd.f32 0.0, %v1319
        %v1321 = vpop.f32.mrb[0].mxu0
        %v1322 = vadd.f32 0.0, %v1321
        %1323 = vmatprep.mubr.bf16.mxu0 0
        %1324 = vmatmul.mubr.bf16.gmra.mrb[0].mxu0 %v1115
        %v1325 = vpop.f32.mrb[0].mxu0
        %v1326 = vadd.f32 0.0, %v1325
        %v1327 = vpop.f32.mrb[0].mxu0
        %v1328 = vadd.f32 0.0, %v1327
        %v1329 = vpop.f32.mrb[0].mxu0
        %v1330 = vadd.f32 0.0, %v1329
        %v1331 = vpop.f32.mrb[0].mxu0
        %v1332 = vadd.f32 0.0, %v1331
        %1333 = vmatprep.mubr.bf16.mxu0 0
        %1334 = vmatmul.mubr.bf16.gmra.mrb[0].mxu0 %v1118
        %v1335 = vpop.f32.mrb[0].mxu0
        %v1336 = vadd.f32 0.0, %v1335
        %v1337 = vpop.f32.mrb[0].mxu0
        %v1338 = vadd.f32 0.0, %v1337
        %v1339 = vpop.f32.mrb[0].mxu0
        %v1340 = vadd.f32 0.0, %v1339
        %v1341 = vpop.f32.mrb[0].mxu0
        %v1342 = vadd.f32 0.0, %v1341
        %1343 = vmatprep.mubr.bf16.mxu0 0
        %1344 = vmatmul.mubr.bf16.gmra.mrb[0].mxu0 %v1121
        %v1345 = vpop.f32.mrb[0].mxu0
        %v1346 = vadd.f32 0.0, %v1345
        %v1347 = vpop.f32.mrb[0].mxu0
        %v1348 = vadd.f32 0.0, %v1347
        %v1349 = vpop.f32.mrb[0].mxu0
        %v1350 = vadd.f32 0.0, %v1349
        %v1351 = vpop.f32.mrb[0].mxu0
        %v1352 = vadd.f32 0.0, %v1351
        %1353 = vmatprep.mubr.bf16.mxu0 0
        %1354 = vmatmul.mubr.bf16.gmra.mrb[0].mxu0 %v1124
        %v1355 = vpop.f32.mrb[0].mxu0
        %v1356 = vadd.f32 0.0, %v1355
        %v1357 = vpop.f32.mrb[0].mxu0
        %v1358 = vadd.f32 0.0, %v1357
        %v1359 = vpop.f32.mrb[0].mxu0
        %v1360 = vadd.f32 0.0, %v1359
        %v1361 = vpop.f32.mrb[0].mxu0
        %v1362 = vadd.f32 0.0, %v1361
        %1363 = vmatprep.mubr.bf16.mxu0 0
        %1364 = vmatmul.mubr.bf16.gmra.mrb[0].mxu0 %v1127
        %v1365 = vpop.f32.mrb[0].mxu0
        %v1366 = vadd.f32 0.0, %v1365
        %v1367 = vpop.f32.mrb[0].mxu0
        %v1368 = vadd.f32 0.0, %v1367
        %v1369 = vpop.f32.mrb[0].mxu0
        %v1370 = vadd.f32 0.0, %v1369
        %v1371 = vpop.f32.mrb[0].mxu0
        %v1372 = vadd.f32 0.0, %v1371
        %1373 = vmatprep.mubr.bf16.mxu0 0
        %1374 = vmatmul.mubr.bf16.gmra.mrb[0].mxu0 %v1130
        %v1375 = vpop.f32.mrb[0].mxu0
        %v1376 = vadd.f32 0.0, %v1375
        %v1377 = vpop.f32.mrb[0].mxu0
        %v1378 = vadd.f32 0.0, %v1377
        %v1379 = vpop.f32.mrb[0].mxu0
        %v1380 = vadd.f32 0.0, %v1379
        %v1381 = vpop.f32.mrb[0].mxu0
        %v1382 = vadd.f32 0.0, %v1381
        %1383 = vmatprep.mubr.bf16.mxu0 0
        %1384 = vmatmul.mubr.bf16.gmra.mrb[0].mxu0 %v1133
        %v1385 = vpop.f32.mrb[0].mxu0
        %v1386 = vadd.f32 0.0, %v1385
        %v1387 = vpop.f32.mrb[0].mxu0
        %v1388 = vadd.f32 0.0, %v1387
        %v1389 = vpop.f32.mrb[0].mxu0
        %v1390 = vadd.f32 0.0, %v1389
        %v1391 = vpop.f32.mrb[0].mxu0
        %v1392 = vadd.f32 0.0, %v1391
        %1393 = vmatprep.mubr.bf16.mxu0 0
        %1394 = vmatmul.mubr.bf16.gmra.mrb[0].mxu0 %v1136
        %v1395 = vpop.f32.mrb[0].mxu0
        %v1396 = vadd.f32 0.0, %v1395
        %v1397 = vpop.f32.mrb[0].mxu0
        %v1398 = vadd.f32 0.0, %v1397
        %v1399 = vpop.f32.mrb[0].mxu0
        %v1400 = vadd.f32 0.0, %v1399
        %v1401 = vpop.f32.mrb[0].mxu0
        %v1402 = vadd.f32 0.0, %v1401
        %1403 = vmatprep.mubr.bf16.mxu0 0
        %1404 = vmatmul.mubr.bf16.gmra.mrb[0].mxu0 %v1139
        %v1405 = vpop.f32.mrb[0].mxu0
        %v1406 = vadd.f32 0.0, %v1405
        %v1407 = vpop.f32.mrb[0].mxu0
        %v1408 = vadd.f32 0.0, %v1407
        %v1409 = vpop.f32.mrb[0].mxu0
        %v1410 = vadd.f32 0.0, %v1409
        %v1411 = vpop.f32.mrb[0].mxu0
        %v1412 = vadd.f32 0.0, %v1411
        %1413 = vdwg.mxu0
        %1414 = vmatprep.subr.bf16.mxu0 0
        %1415 = vmatpush1.bf16.msra.mxu0 %v476
        %1416 = vmatprep.subr.bf16.mxu0 0
        %1417 = vmatpush1.bf16.msra.mxu0 %v479
        %1418 = vmatprep.subr.bf16.mxu0 0
        %1419 = vmatpush1.bf16.msra.mxu0 %v482
        %1420 = vmatprep.subr.bf16.mxu0 0
        %1421 = vmatpush1.bf16.msra.mxu0 %v485
        %1422 = vmatprep.subr.bf16.mxu0 0
        %1423 = vmatpush1.bf16.msra.mxu0 0
        %1424 = vmatprep.subr.bf16.mxu0 0
        %1425 = vmatpush1.bf16.msra.mxu0 0
        %1426 = vmatprep.subr.bf16.mxu0 0
        %1427 = vmatpush1.bf16.msra.mxu0 0
        %1428 = vmatprep.subr.bf16.mxu0 0
        %1429 = vmatpush1.bf16.msra.mxu0 0
        %1430 = vmatprep.subr.bf16.mxu0 0
        %1431 = vmatpush1.bf16.msra.mxu0 0
        %1432 = vmatprep.subr.bf16.mxu0 0
        %1433 = vmatpush1.bf16.msra.mxu0 0
        %1434 = vmatprep.subr.bf16.mxu0 0
        %1435 = vmatpush1.bf16.msra.mxu0 0
        %1436 = vmatprep.subr.bf16.mxu0 0
        %1437 = vmatpush1.bf16.msra.mxu0 0
        %1438 = vmatprep.subr.bf16.mxu0 0
        %1439 = vmatpush1.bf16.msra.mxu0 0
        %1440 = vmatprep.subr.bf16.mxu0 0
        %1441 = vmatpush1.bf16.msra.mxu0 0
        %1442 = vmatprep.subr.bf16.mxu0 0
        %1443 = vmatpush1.bf16.msra.mxu0 0
        %1444 = vmatprep.subr.bf16.mxu0 0
        %1445 = vmatpush1.bf16.msra.mxu0 0
        %1446 = vmatprep.mubr.bf16.mxu0 0
        %1447 = vmatmul.mubr.bf16.gmra.mrb[0].mxu0 %v1070
        %v1448 = vpop.f32.mrb[0].mxu0
        %v1449 = vadd.f32 0.0, %v1448
        %v1450 = vpop.f32.mrb[0].mxu0
        %v1451 = vpop.f32.mrb[0].mxu0
        %v1452 = vadd.f32 0.0, %v1451
        %v1453 = vpop.f32.mrb[0].mxu0
        %1454 = vmatprep.mubr.bf16.mxu0 0
        %1455 = vmatmul.mubr.bf16.gmra.mrb[0].mxu0 %v1073
        %v1456 = vpop.f32.mrb[0].mxu0
        %v1457 = vadd.f32 0.0, %v1456
        %v1458 = vpop.f32.mrb[0].mxu0
        %v1459 = vpop.f32.mrb[0].mxu0
        %v1460 = vadd.f32 0.0, %v1459
        %v1461 = vpop.f32.mrb[0].mxu0
        %1462 = vmatprep.mubr.bf16.mxu0 0
        %1463 = vmatmul.mubr.bf16.gmra.mrb[0].mxu0 %v1076
        %v1464 = vpop.f32.mrb[0].mxu0
        %v1465 = vadd.f32 0.0, %v1464
        %v1466 = vpop.f32.mrb[0].mxu0
        %v1467 = vpop.f32.mrb[0].mxu0
        %v1468 = vadd.f32 0.0, %v1467
        %v1469 = vpop.f32.mrb[0].mxu0
        %1470 = vmatprep.mubr.bf16.mxu0 0
        %1471 = vmatmul.mubr.bf16.gmra.mrb[0].mxu0 %v1079
        %v1472 = vpop.f32.mrb[0].mxu0
        %v1473 = vadd.f32 0.0, %v1472
        %v1474 = vpop.f32.mrb[0].mxu0
        %v1475 = vpop.f32.mrb[0].mxu0
        %v1476 = vadd.f32 0.0, %v1475
        %v1477 = vpop.f32.mrb[0].mxu0
        %1478 = vmatprep.mubr.bf16.mxu0 0
        %1479 = vmatmul.mubr.bf16.gmra.mrb[0].mxu0 %v1082
        %v1480 = vpop.f32.mrb[0].mxu0
        %v1481 = vadd.f32 0.0, %v1480
        %v1482 = vpop.f32.mrb[0].mxu0
        %v1483 = vpop.f32.mrb[0].mxu0
        %v1484 = vadd.f32 0.0, %v1483
        %v1485 = vpop.f32.mrb[0].mxu0
        %1486 = vmatprep.mubr.bf16.mxu0 0
        %1487 = vmatmul.mubr.bf16.gmra.mrb[0].mxu0 %v1085
        %v1488 = vpop.f32.mrb[0].mxu0
        %v1489 = vadd.f32 0.0, %v1488
        %v1490 = vpop.f32.mrb[0].mxu0
        %v1491 = vpop.f32.mrb[0].mxu0
        %v1492 = vadd.f32 0.0, %v1491
        %v1493 = vpop.f32.mrb[0].mxu0
        %1494 = vmatprep.mubr.bf16.mxu0 0
        %1495 = vmatmul.mubr.bf16.gmra.mrb[0].mxu0 %v1088
        %v1496 = vpop.f32.mrb[0].mxu0
        %v1497 = vadd.f32 0.0, %v1496
        %v1498 = vpop.f32.mrb[0].mxu0
        %v1499 = vpop.f32.mrb[0].mxu0
        %v1500 = vadd.f32 0.0, %v1499
        %v1501 = vpop.f32.mrb[0].mxu0
        %1502 = vmatprep.mubr.bf16.mxu0 0
        %1503 = vmatmul.mubr.bf16.gmra.mrb[0].mxu0 %v1091
        %v1504 = vpop.f32.mrb[0].mxu0
        %v1505 = vadd.f32 0.0, %v1504
        %v1506 = vpop.f32.mrb[0].mxu0
        %v1507 = vpop.f32.mrb[0].mxu0
        %v1508 = vadd.f32 0.0, %v1507
        %v1509 = vpop.f32.mrb[0].mxu0
        %1510 = vmatprep.mubr.bf16.mxu0 0
        %1511 = vmatmul.mubr.bf16.gmra.mrb[0].mxu0 %v1094
        %v1512 = vpop.f32.mrb[0].mxu0
        %v1513 = vadd.f32 0.0, %v1512
        %v1514 = vpop.f32.mrb[0].mxu0
        %v1515 = vpop.f32.mrb[0].mxu0
        %v1516 = vadd.f32 0.0, %v1515
        %v1517 = vpop.f32.mrb[0].mxu0
        %1518 = vmatprep.mubr.bf16.mxu0 0
        %1519 = vmatmul.mubr.bf16.gmra.mrb[0].mxu0 %v1097
        %v1520 = vpop.f32.mrb[0].mxu0
        %v1521 = vadd.f32 0.0, %v1520
        %v1522 = vpop.f32.mrb[0].mxu0
        %v1523 = vpop.f32.mrb[0].mxu0
        %v1524 = vadd.f32 0.0, %v1523
        %v1525 = vpop.f32.mrb[0].mxu0
        %1526 = vmatprep.mubr.bf16.mxu0 0
        %1527 = vmatmul.mubr.bf16.gmra.mrb[0].mxu0 %v1100
        %v1528 = vpop.f32.mrb[0].mxu0
        %v1529 = vadd.f32 0.0, %v1528
        %v1530 = vpop.f32.mrb[0].mxu0
        %v1531 = vpop.f32.mrb[0].mxu0
        %v1532 = vadd.f32 0.0, %v1531
        %v1533 = vpop.f32.mrb[0].mxu0
        %1534 = vmatprep.mubr.bf16.mxu0 0
        %1535 = vmatmul.mubr.bf16.gmra.mrb[0].mxu0 %v1103
        %v1536 = vpop.f32.mrb[0].mxu0
        %v1537 = vadd.f32 0.0, %v1536
        %v1538 = vpop.f32.mrb[0].mxu0
        %v1539 = vpop.f32.mrb[0].mxu0
        %v1540 = vadd.f32 0.0, %v1539
        %v1541 = vpop.f32.mrb[0].mxu0
        %1542 = vmatprep.mubr.bf16.mxu0 0
        %1543 = vmatmul.mubr.bf16.gmra.mrb[0].mxu0 %v1106
        %v1544 = vpop.f32.mrb[0].mxu0
        %v1545 = vadd.f32 0.0, %v1544
        %v1546 = vpop.f32.mrb[0].mxu0
        %v1547 = vpop.f32.mrb[0].mxu0
        %v1548 = vadd.f32 0.0, %v1547
        %v1549 = vpop.f32.mrb[0].mxu0
        %1550 = vmatprep.mubr.bf16.mxu0 0
        %1551 = vmatmul.mubr.bf16.gmra.mrb[0].mxu0 %v1109
        %v1552 = vpop.f32.mrb[0].mxu0
        %v1553 = vadd.f32 0.0, %v1552
        %v1554 = vpop.f32.mrb[0].mxu0
        %v1555 = vpop.f32.mrb[0].mxu0
        %v1556 = vadd.f32 0.0, %v1555
        %v1557 = vpop.f32.mrb[0].mxu0
        %1558 = vmatprep.mubr.bf16.mxu0 0
        %1559 = vmatmul.mubr.bf16.gmra.mrb[0].mxu0 %v1112
        %v1560 = vpop.f32.mrb[0].mxu0
        %v1561 = vadd.f32 0.0, %v1560
        %v1562 = vpop.f32.mrb[0].mxu0
        %v1563 = vpop.f32.mrb[0].mxu0
        %v1564 = vadd.f32 0.0, %v1563
        %v1565 = vpop.f32.mrb[0].mxu0
        %1566 = vmatprep.mubr.bf16.mxu0 0
        %1567 = vmatmul.mubr.bf16.gmra.mrb[0].mxu0 %v1115
        %v1568 = vpop.f32.mrb[0].mxu0
        %v1569 = vadd.f32 0.0, %v1568
        %v1570 = vpop.f32.mrb[0].mxu0
        %v1571 = vpop.f32.mrb[0].mxu0
        %v1572 = vadd.f32 0.0, %v1571
        %v1573 = vpop.f32.mrb[0].mxu0
        %1574 = vmatprep.mubr.bf16.mxu0 0
        %1575 = vmatmul.mubr.bf16.gmra.mrb[0].mxu0 %v1118
        %v1576 = vpop.f32.mrb[0].mxu0
        %v1577 = vadd.f32 0.0, %v1576
        %v1578 = vpop.f32.mrb[0].mxu0
        %v1579 = vpop.f32.mrb[0].mxu0
        %v1580 = vadd.f32 0.0, %v1579
        %v1581 = vpop.f32.mrb[0].mxu0
        %1582 = vmatprep.mubr.bf16.mxu0 0
        %1583 = vmatmul.mubr.bf16.gmra.mrb[0].mxu0 %v1121
        %v1584 = vpop.f32.mrb[0].mxu0
        %v1585 = vadd.f32 0.0, %v1584
        %v1586 = vpop.f32.mrb[0].mxu0
        %v1587 = vpop.f32.mrb[0].mxu0
        %v1588 = vadd.f32 0.0, %v1587
        %v1589 = vpop.f32.mrb[0].mxu0
        %1590 = vmatprep.mubr.bf16.mxu0 0
        %1591 = vmatmul.mubr.bf16.gmra.mrb[0].mxu0 %v1124
        %v1592 = vpop.f32.mrb[0].mxu0
        %v1593 = vadd.f32 0.0, %v1592
        %v1594 = vpop.f32.mrb[0].mxu0
        %v1595 = vpop.f32.mrb[0].mxu0
        %v1596 = vadd.f32 0.0, %v1595
        %v1597 = vpop.f32.mrb[0].mxu0
        %1598 = vmatprep.mubr.bf16.mxu0 0
        %1599 = vmatmul.mubr.bf16.gmra.mrb[0].mxu0 %v1127
        %v1600 = vpop.f32.mrb[0].mxu0
        %v1601 = vadd.f32 0.0, %v1600
        %v1602 = vpop.f32.mrb[0].mxu0
        %v1603 = vpop.f32.mrb[0].mxu0
        %v1604 = vadd.f32 0.0, %v1603
        %v1605 = vpop.f32.mrb[0].mxu0
        %1606 = vmatprep.mubr.bf16.mxu0 0
        %1607 = vmatmul.mubr.bf16.gmra.mrb[0].mxu0 %v1130
        %v1608 = vpop.f32.mrb[0].mxu0
        %v1609 = vadd.f32 0.0, %v1608
        %v1610 = vpop.f32.mrb[0].mxu0
        %v1611 = vpop.f32.mrb[0].mxu0
        %v1612 = vadd.f32 0.0, %v1611
        %v1613 = vpop.f32.mrb[0].mxu0
        %1614 = vmatprep.mubr.bf16.mxu0 0
        %1615 = vmatmul.mubr.bf16.gmra.mrb[0].mxu0 %v1133
        %v1616 = vpop.f32.mrb[0].mxu0
        %v1617 = vadd.f32 0.0, %v1616
        %v1618 = vpop.f32.mrb[0].mxu0
        %v1619 = vpop.f32.mrb[0].mxu0
        %v1620 = vadd.f32 0.0, %v1619
        %v1621 = vpop.f32.mrb[0].mxu0
        %1622 = vmatprep.mubr.bf16.mxu0 0
        %1623 = vmatmul.mubr.bf16.gmra.mrb[0].mxu0 %v1136
        %v1624 = vpop.f32.mrb[0].mxu0
        %v1625 = vadd.f32 0.0, %v1624
        %v1626 = vpop.f32.mrb[0].mxu0
        %v1627 = vpop.f32.mrb[0].mxu0
        %v1628 = vadd.f32 0.0, %v1627
        %v1629 = vpop.f32.mrb[0].mxu0
        %1630 = vmatprep.mubr.bf16.mxu0 0
        %1631 = vmatmul.mubr.bf16.gmra.mrb[0].mxu0 %v1139
        %v1632 = vpop.f32.mrb[0].mxu0
        %v1633 = vadd.f32 0.0, %v1632
        %v1634 = vpop.f32.mrb[0].mxu0
        %v1635 = vpop.f32.mrb[0].mxu0
        %v1636 = vadd.f32 0.0, %v1635
        %v1637 = vpop.f32.mrb[0].mxu0
        %1638 = vdwg.mxu0
        %v1640 = vsel %vm498, %v438, 0
        %v1643 = vsel %vm498, %v439, 0
        %v1646 = vsel %vm498, %v440, 0
        %v1649 = vsel %vm498, %v441, 0
        %v1652 = vsel %vm498, %v442, 0
        %v1655 = vsel %vm498, %v443, 0
        %v1658 = vsel %vm498, %v444, 0
        %v1661 = vsel %vm498, %v445, 0
        %v1664 = vsel %vm498, %v446, 0
        %v1667 = vsel %vm498, %v447, 0
        %v1670 = vsel %vm498, %v448, 0
        %v1673 = vsel %vm498, %v449, 0
        %v1676 = vsel %vm498, %v450, 0
        %v1679 = vsel %vm498, %v451, 0
        %v1682 = vsel %vm498, %v452, 0
        %v1685 = vsel %vm498, %v453, 0
        %v1688 = vsel %vm498, %v454, 0
        %v1691 = vsel %vm498, %v455, 0
        %v1694 = vsel %vm498, %v456, 0
        %v1697 = vsel %vm498, %v457, 0
        %v1700 = vsel %vm498, %v458, 0
        %v1703 = vsel %vm498, %v459, 0
        %v1706 = vsel %vm498, %v460, 0
        %v1709 = vsel %vm498, %v461, 0
        %1711 = vmatprep.subr.bf16.mxu0 %v487
        %1712 = vmatpush1.bf16.msra.mxu0 %v486
        %1713 = vmatprep.subr.bf16.mxu0 %v490
        %1714 = vmatpush1.bf16.msra.mxu0 %v489
        %1715 = vmatprep.subr.bf16.mxu0 %v493
        %1716 = vmatpush1.bf16.msra.mxu0 %v492
        %1717 = vmatprep.subr.bf16.mxu0 %v496
        %1718 = vmatpush1.bf16.msra.mxu0 %v495
        %1719 = vmatprep.subr.bf16.mxu0 0
        %1720 = vmatpush1.bf16.msra.mxu0 0
        %1721 = vmatprep.subr.bf16.mxu0 0
        %1722 = vmatpush1.bf16.msra.mxu0 0
        %1723 = vmatprep.subr.bf16.mxu0 0
        %1724 = vmatpush1.bf16.msra.mxu0 0
        %1725 = vmatprep.subr.bf16.mxu0 0
        %1726 = vmatpush1.bf16.msra.mxu0 0
        %1727 = vmatprep.subr.bf16.mxu0 0
        %1728 = vmatpush1.bf16.msra.mxu0 0
        %1729 = vmatprep.subr.bf16.mxu0 0
        %1730 = vmatpush1.bf16.msra.mxu0 0
        %1731 = vmatprep.subr.bf16.mxu0 0
        %1732 = vmatpush1.bf16.msra.mxu0 0
        %1733 = vmatprep.subr.bf16.mxu0 0
        %1734 = vmatpush1.bf16.msra.mxu0 0
        %1735 = vmatprep.subr.bf16.mxu0 0
        %1736 = vmatpush1.bf16.msra.mxu0 0
        %1737 = vmatprep.subr.bf16.mxu0 0
        %1738 = vmatpush1.bf16.msra.mxu0 0
        %1739 = vmatprep.subr.bf16.mxu0 0
        %1740 = vmatpush1.bf16.msra.mxu0 0
        %1741 = vmatprep.subr.bf16.mxu0 0
        %1742 = vmatpush1.bf16.msra.mxu0 0
        %1743 = vmatprep.mubr.bf16.mxu0 0
        %1744 = vmatmul.mubr.bf16.gmra.mrb[0].mxu0 %v1640
        %v1745 = vpop.f32.mrb[0].mxu0
        %v1746 = vadd.f32 0.0, %v1745
        %v1747 = vpop.f32.mrb[0].mxu0
        %v1748 = vadd.f32 0.0, %v1747
        %v1749 = vpop.f32.mrb[0].mxu0
        %v1750 = vadd.f32 0.0, %v1749
        %v1751 = vpop.f32.mrb[0].mxu0
        %v1752 = vadd.f32 0.0, %v1751
        %1753 = vmatprep.mubr.bf16.mxu0 0
        %1754 = vmatmul.mubr.bf16.gmra.mrb[0].mxu0 %v1643
        %v1755 = vpop.f32.mrb[0].mxu0
        %v1756 = vadd.f32 0.0, %v1755
        %v1757 = vpop.f32.mrb[0].mxu0
        %v1758 = vadd.f32 0.0, %v1757
        %v1759 = vpop.f32.mrb[0].mxu0
        %v1760 = vadd.f32 0.0, %v1759
        %v1761 = vpop.f32.mrb[0].mxu0
        %v1762 = vadd.f32 0.0, %v1761
        %1763 = vmatprep.mubr.bf16.mxu0 0
        %1764 = vmatmul.mubr.bf16.gmra.mrb[0].mxu0 %v1646
        %v1765 = vpop.f32.mrb[0].mxu0
        %v1766 = vadd.f32 0.0, %v1765
        %v1767 = vpop.f32.mrb[0].mxu0
        %v1768 = vadd.f32 0.0, %v1767
        %v1769 = vpop.f32.mrb[0].mxu0
        %v1770 = vadd.f32 0.0, %v1769
        %v1771 = vpop.f32.mrb[0].mxu0
        %v1772 = vadd.f32 0.0, %v1771
        %1773 = vmatprep.mubr.bf16.mxu0 0
        %1774 = vmatmul.mubr.bf16.gmra.mrb[0].mxu0 %v1649
        %v1775 = vpop.f32.mrb[0].mxu0
        %v1776 = vadd.f32 0.0, %v1775
        %v1777 = vpop.f32.mrb[0].mxu0
        %v1778 = vadd.f32 0.0, %v1777
        %v1779 = vpop.f32.mrb[0].mxu0
        %v1780 = vadd.f32 0.0, %v1779
        %v1781 = vpop.f32.mrb[0].mxu0
        %v1782 = vadd.f32 0.0, %v1781
        %1783 = vmatprep.mubr.bf16.mxu0 0
        %1784 = vmatmul.mubr.bf16.gmra.mrb[0].mxu0 %v1652
        %v1785 = vpop.f32.mrb[0].mxu0
        %v1786 = vadd.f32 0.0, %v1785
        %v1787 = vpop.f32.mrb[0].mxu0
        %v1788 = vadd.f32 0.0, %v1787
        %v1789 = vpop.f32.mrb[0].mxu0
        %v1790 = vadd.f32 0.0, %v1789
        %v1791 = vpop.f32.mrb[0].mxu0
        %v1792 = vadd.f32 0.0, %v1791
        %1793 = vmatprep.mubr.bf16.mxu0 0
        %1794 = vmatmul.mubr.bf16.gmra.mrb[0].mxu0 %v1655
        %v1795 = vpop.f32.mrb[0].mxu0
        %v1796 = vadd.f32 0.0, %v1795
        %v1797 = vpop.f32.mrb[0].mxu0
        %v1798 = vadd.f32 0.0, %v1797
        %v1799 = vpop.f32.mrb[0].mxu0
        %v1800 = vadd.f32 0.0, %v1799
        %v1801 = vpop.f32.mrb[0].mxu0
        %v1802 = vadd.f32 0.0, %v1801
        %1803 = vmatprep.mubr.bf16.mxu0 0
        %1804 = vmatmul.mubr.bf16.gmra.mrb[0].mxu0 %v1658
        %v1805 = vpop.f32.mrb[0].mxu0
        %v1806 = vadd.f32 0.0, %v1805
        %v1807 = vpop.f32.mrb[0].mxu0
        %v1808 = vadd.f32 0.0, %v1807
        %v1809 = vpop.f32.mrb[0].mxu0
        %v1810 = vadd.f32 0.0, %v1809
        %v1811 = vpop.f32.mrb[0].mxu0
        %v1812 = vadd.f32 0.0, %v1811
        %1813 = vmatprep.mubr.bf16.mxu0 0
        %1814 = vmatmul.mubr.bf16.gmra.mrb[0].mxu0 %v1661
        %v1815 = vpop.f32.mrb[0].mxu0
        %v1816 = vadd.f32 0.0, %v1815
        %v1817 = vpop.f32.mrb[0].mxu0
        %v1818 = vadd.f32 0.0, %v1817
        %v1819 = vpop.f32.mrb[0].mxu0
        %v1820 = vadd.f32 0.0, %v1819
        %v1821 = vpop.f32.mrb[0].mxu0
        %v1822 = vadd.f32 0.0, %v1821
        %1823 = vmatprep.mubr.bf16.mxu0 0
        %1824 = vmatmul.mubr.bf16.gmra.mrb[0].mxu0 %v1664
        %v1825 = vpop.f32.mrb[0].mxu0
        %v1826 = vadd.f32 0.0, %v1825
        %v1827 = vpop.f32.mrb[0].mxu0
        %v1828 = vadd.f32 0.0, %v1827
        %v1829 = vpop.f32.mrb[0].mxu0
        %v1830 = vadd.f32 0.0, %v1829
        %v1831 = vpop.f32.mrb[0].mxu0
        %v1832 = vadd.f32 0.0, %v1831
        %1833 = vmatprep.mubr.bf16.mxu0 0
        %1834 = vmatmul.mubr.bf16.gmra.mrb[0].mxu0 %v1667
        %v1835 = vpop.f32.mrb[0].mxu0
        %v1836 = vadd.f32 0.0, %v1835
        %v1837 = vpop.f32.mrb[0].mxu0
        %v1838 = vadd.f32 0.0, %v1837
        %v1839 = vpop.f32.mrb[0].mxu0
        %v1840 = vadd.f32 0.0, %v1839
        %v1841 = vpop.f32.mrb[0].mxu0
        %v1842 = vadd.f32 0.0, %v1841
        %1843 = vmatprep.mubr.bf16.mxu0 0
        %1844 = vmatmul.mubr.bf16.gmra.mrb[0].mxu0 %v1670
        %v1845 = vpop.f32.mrb[0].mxu0
        %v1846 = vadd.f32 0.0, %v1845
        %v1847 = vpop.f32.mrb[0].mxu0
        %v1848 = vadd.f32 0.0, %v1847
        %v1849 = vpop.f32.mrb[0].mxu0
        %v1850 = vadd.f32 0.0, %v1849
        %v1851 = vpop.f32.mrb[0].mxu0
        %v1852 = vadd.f32 0.0, %v1851
        %1853 = vmatprep.mubr.bf16.mxu0 0
        %1854 = vmatmul.mubr.bf16.gmra.mrb[0].mxu0 %v1673
        %v1855 = vpop.f32.mrb[0].mxu0
        %v1856 = vadd.f32 0.0, %v1855
        %v1857 = vpop.f32.mrb[0].mxu0
        %v1858 = vadd.f32 0.0, %v1857
        %v1859 = vpop.f32.mrb[0].mxu0
        %v1860 = vadd.f32 0.0, %v1859
        %v1861 = vpop.f32.mrb[0].mxu0
        %v1862 = vadd.f32 0.0, %v1861
        %1863 = vmatprep.mubr.bf16.mxu0 0
        %1864 = vmatmul.mubr.bf16.gmra.mrb[0].mxu0 %v1676
        %v1865 = vpop.f32.mrb[0].mxu0
        %v1866 = vadd.f32 0.0, %v1865
        %v1867 = vpop.f32.mrb[0].mxu0
        %v1868 = vadd.f32 0.0, %v1867
        %v1869 = vpop.f32.mrb[0].mxu0
        %v1870 = vadd.f32 0.0, %v1869
        %v1871 = vpop.f32.mrb[0].mxu0
        %v1872 = vadd.f32 0.0, %v1871
        %1873 = vmatprep.mubr.bf16.mxu0 0
        %1874 = vmatmul.mubr.bf16.gmra.mrb[0].mxu0 %v1679
        %v1875 = vpop.f32.mrb[0].mxu0
        %v1876 = vadd.f32 0.0, %v1875
        %v1877 = vpop.f32.mrb[0].mxu0
        %v1878 = vadd.f32 0.0, %v1877
        %v1879 = vpop.f32.mrb[0].mxu0
        %v1880 = vadd.f32 0.0, %v1879
        %v1881 = vpop.f32.mrb[0].mxu0
        %v1882 = vadd.f32 0.0, %v1881
        %1883 = vmatprep.mubr.bf16.mxu0 0
        %1884 = vmatmul.mubr.bf16.gmra.mrb[0].mxu0 %v1682
        %v1885 = vpop.f32.mrb[0].mxu0
        %v1886 = vadd.f32 0.0, %v1885
        %v1887 = vpop.f32.mrb[0].mxu0
        %v1888 = vadd.f32 0.0, %v1887
        %v1889 = vpop.f32.mrb[0].mxu0
        %v1890 = vadd.f32 0.0, %v1889
        %v1891 = vpop.f32.mrb[0].mxu0
        %v1892 = vadd.f32 0.0, %v1891
        %1893 = vmatprep.mubr.bf16.mxu0 0
        %1894 = vmatmul.mubr.bf16.gmra.mrb[0].mxu0 %v1685
        %v1895 = vpop.f32.mrb[0].mxu0
        %v1896 = vadd.f32 0.0, %v1895
        %v1897 = vpop.f32.mrb[0].mxu0
        %v1898 = vadd.f32 0.0, %v1897
        %v1899 = vpop.f32.mrb[0].mxu0
        %v1900 = vadd.f32 0.0, %v1899
        %v1901 = vpop.f32.mrb[0].mxu0
        %v1902 = vadd.f32 0.0, %v1901
        %1903 = vmatprep.mubr.bf16.mxu0 0
        %1904 = vmatmul.mubr.bf16.gmra.mrb[0].mxu0 %v1688
        %v1905 = vpop.f32.mrb[0].mxu0
        %v1906 = vadd.f32 0.0, %v1905
        %v1907 = vpop.f32.mrb[0].mxu0
        %v1908 = vadd.f32 0.0, %v1907
        %v1909 = vpop.f32.mrb[0].mxu0
        %v1910 = vadd.f32 0.0, %v1909
        %v1911 = vpop.f32.mrb[0].mxu0
        %v1912 = vadd.f32 0.0, %v1911
        %1913 = vmatprep.mubr.bf16.mxu0 0
        %1914 = vmatmul.mubr.bf16.gmra.mrb[0].mxu0 %v1691
        %v1915 = vpop.f32.mrb[0].mxu0
        %v1916 = vadd.f32 0.0, %v1915
        %v1917 = vpop.f32.mrb[0].mxu0
        %v1918 = vadd.f32 0.0, %v1917
        %v1919 = vpop.f32.mrb[0].mxu0
        %v1920 = vadd.f32 0.0, %v1919
        %v1921 = vpop.f32.mrb[0].mxu0
        %v1922 = vadd.f32 0.0, %v1921
        %1923 = vmatprep.mubr.bf16.mxu0 0
        %1924 = vmatmul.mubr.bf16.gmra.mrb[0].mxu0 %v1694
        %v1925 = vpop.f32.mrb[0].mxu0
        %v1926 = vadd.f32 0.0, %v1925
        %v1927 = vpop.f32.mrb[0].mxu0
        %v1928 = vadd.f32 0.0, %v1927
        %v1929 = vpop.f32.mrb[0].mxu0
        %v1930 = vadd.f32 0.0, %v1929
        %v1931 = vpop.f32.mrb[0].mxu0
        %v1932 = vadd.f32 0.0, %v1931
        %1933 = vmatprep.mubr.bf16.mxu0 0
        %1934 = vmatmul.mubr.bf16.gmra.mrb[0].mxu0 %v1697
        %v1935 = vpop.f32.mrb[0].mxu0
        %v1936 = vadd.f32 0.0, %v1935
        %v1937 = vpop.f32.mrb[0].mxu0
        %v1938 = vadd.f32 0.0, %v1937
        %v1939 = vpop.f32.mrb[0].mxu0
        %v1940 = vadd.f32 0.0, %v1939
        %v1941 = vpop.f32.mrb[0].mxu0
        %v1942 = vadd.f32 0.0, %v1941
        %1943 = vmatprep.mubr.bf16.mxu0 0
        %1944 = vmatmul.mubr.bf16.gmra.mrb[0].mxu0 %v1700
        %v1945 = vpop.f32.mrb[0].mxu0
        %v1946 = vadd.f32 0.0, %v1945
        %v1947 = vpop.f32.mrb[0].mxu0
        %v1948 = vadd.f32 0.0, %v1947
        %v1949 = vpop.f32.mrb[0].mxu0
        %v1950 = vadd.f32 0.0, %v1949
        %v1951 = vpop.f32.mrb[0].mxu0
        %v1952 = vadd.f32 0.0, %v1951
        %1953 = vmatprep.mubr.bf16.mxu0 0
        %1954 = vmatmul.mubr.bf16.gmra.mrb[0].mxu0 %v1703
        %v1955 = vpop.f32.mrb[0].mxu0
        %v1956 = vadd.f32 0.0, %v1955
        %v1957 = vpop.f32.mrb[0].mxu0
        %v1958 = vadd.f32 0.0, %v1957
        %v1959 = vpop.f32.mrb[0].mxu0
        %v1960 = vadd.f32 0.0, %v1959
        %v1961 = vpop.f32.mrb[0].mxu0
        %v1962 = vadd.f32 0.0, %v1961
        %1963 = vmatprep.mubr.bf16.mxu0 0
        %1964 = vmatmul.mubr.bf16.gmra.mrb[0].mxu0 %v1706
        %v1965 = vpop.f32.mrb[0].mxu0
        %v1966 = vadd.f32 0.0, %v1965
        %v1967 = vpop.f32.mrb[0].mxu0
        %v1968 = vadd.f32 0.0, %v1967
        %v1969 = vpop.f32.mrb[0].mxu0
        %v1970 = vadd.f32 0.0, %v1969
        %v1971 = vpop.f32.mrb[0].mxu0
        %v1972 = vadd.f32 0.0, %v1971
        %1973 = vmatprep.mubr.bf16.mxu0 0
        %1974 = vmatmul.mubr.bf16.gmra.mrb[0].mxu0 %v1709
        %v1975 = vpop.f32.mrb[0].mxu0
        %v1976 = vadd.f32 0.0, %v1975
        %v1977 = vpop.f32.mrb[0].mxu0
        %v1978 = vadd.f32 0.0, %v1977
        %v1979 = vpop.f32.mrb[0].mxu0
        %v1980 = vadd.f32 0.0, %v1979
        %v1981 = vpop.f32.mrb[0].mxu0
        %v1982 = vadd.f32 0.0, %v1981
        %1983 = vdwg.mxu0
        %1984 = vmatprep.subr.bf16.mxu0 0
        %1985 = vmatpush1.bf16.msra.mxu0 %v488
        %1986 = vmatprep.subr.bf16.mxu0 0
        %1987 = vmatpush1.bf16.msra.mxu0 %v491
        %1988 = vmatprep.subr.bf16.mxu0 0
        %1989 = vmatpush1.bf16.msra.mxu0 %v494
        %1990 = vmatprep.subr.bf16.mxu0 0
        %1991 = vmatpush1.bf16.msra.mxu0 %v497
        %1992 = vmatprep.subr.bf16.mxu0 0
        %1993 = vmatpush1.bf16.msra.mxu0 0
        %1994 = vmatprep.subr.bf16.mxu0 0
        %1995 = vmatpush1.bf16.msra.mxu0 0
        %1996 = vmatprep.subr.bf16.mxu0 0
        %1997 = vmatpush1.bf16.msra.mxu0 0
        %1998 = vmatprep.subr.bf16.mxu0 0
        %1999 = vmatpush1.bf16.msra.mxu0 0
        %2000 = vmatprep.subr.bf16.mxu0 0
        %2001 = vmatpush1.bf16.msra.mxu0 0
        %2002 = vmatprep.subr.bf16.mxu0 0
        %2003 = vmatpush1.bf16.msra.mxu0 0
        %2004 = vmatprep.subr.bf16.mxu0 0
        %2005 = vmatpush1.bf16.msra.mxu0 0
        %2006 = vmatprep.subr.bf16.mxu0 0
        %2007 = vmatpush1.bf16.msra.mxu0 0
        %2008 = vmatprep.subr.bf16.mxu0 0
        %2009 = vmatpush1.bf16.msra.mxu0 0
        %2010 = vmatprep.subr.bf16.mxu0 0
        %2011 = vmatpush1.bf16.msra.mxu0 0
        %2012 = vmatprep.subr.bf16.mxu0 0
        %2013 = vmatpush1.bf16.msra.mxu0 0
        %2014 = vmatprep.subr.bf16.mxu0 0
        %2015 = vmatpush1.bf16.msra.mxu0 0
        %2016 = vmatprep.mubr.bf16.mxu0 0
        %2017 = vmatmul.mubr.bf16.gmra.mrb[0].mxu0 %v1640
        %v2018 = vpop.f32.mrb[0].mxu0
        %v2019 = vadd.f32 0.0, %v2018
        %v2020 = vpop.f32.mrb[0].mxu0
        %v2021 = vpop.f32.mrb[0].mxu0
        %v2022 = vadd.f32 0.0, %v2021
        %v2023 = vpop.f32.mrb[0].mxu0
        %2024 = vmatprep.mubr.bf16.mxu0 0
        %2025 = vmatmul.mubr.bf16.gmra.mrb[0].mxu0 %v1643
        %v2026 = vpop.f32.mrb[0].mxu0
        %v2027 = vadd.f32 0.0, %v2026
        %v2028 = vpop.f32.mrb[0].mxu0
        %v2029 = vpop.f32.mrb[0].mxu0
        %v2030 = vadd.f32 0.0, %v2029
        %v2031 = vpop.f32.mrb[0].mxu0
        %2032 = vmatprep.mubr.bf16.mxu0 0
        %2033 = vmatmul.mubr.bf16.gmra.mrb[0].mxu0 %v1646
        %v2034 = vpop.f32.mrb[0].mxu0
        %v2035 = vadd.f32 0.0, %v2034
        %v2036 = vpop.f32.mrb[0].mxu0
        %v2037 = vpop.f32.mrb[0].mxu0
        %v2038 = vadd.f32 0.0, %v2037
        %v2039 = vpop.f32.mrb[0].mxu0
        %2040 = vmatprep.mubr.bf16.mxu0 0
        %2041 = vmatmul.mubr.bf16.gmra.mrb[0].mxu0 %v1649
        %v2042 = vpop.f32.mrb[0].mxu0
        %v2043 = vadd.f32 0.0, %v2042
        %v2044 = vpop.f32.mrb[0].mxu0
        %v2045 = vpop.f32.mrb[0].mxu0
        %v2046 = vadd.f32 0.0, %v2045
        %v2047 = vpop.f32.mrb[0].mxu0
        %2048 = vmatprep.mubr.bf16.mxu0 0
        %2049 = vmatmul.mubr.bf16.gmra.mrb[0].mxu0 %v1652
        %v2050 = vpop.f32.mrb[0].mxu0
        %v2051 = vadd.f32 0.0, %v2050
        %v2052 = vpop.f32.mrb[0].mxu0
        %v2053 = vpop.f32.mrb[0].mxu0
        %v2054 = vadd.f32 0.0, %v2053
        %v2055 = vpop.f32.mrb[0].mxu0
        %2056 = vmatprep.mubr.bf16.mxu0 0
        %2057 = vmatmul.mubr.bf16.gmra.mrb[0].mxu0 %v1655
        %v2058 = vpop.f32.mrb[0].mxu0
        %v2059 = vadd.f32 0.0, %v2058
        %v2060 = vpop.f32.mrb[0].mxu0
        %v2061 = vpop.f32.mrb[0].mxu0
        %v2062 = vadd.f32 0.0, %v2061
        %v2063 = vpop.f32.mrb[0].mxu0
        %2064 = vmatprep.mubr.bf16.mxu0 0
        %2065 = vmatmul.mubr.bf16.gmra.mrb[0].mxu0 %v1658
        %v2066 = vpop.f32.mrb[0].mxu0
        %v2067 = vadd.f32 0.0, %v2066
        %v2068 = vpop.f32.mrb[0].mxu0
        %v2069 = vpop.f32.mrb[0].mxu0
        %v2070 = vadd.f32 0.0, %v2069
        %v2071 = vpop.f32.mrb[0].mxu0
        %2072 = vmatprep.mubr.bf16.mxu0 0
        %2073 = vmatmul.mubr.bf16.gmra.mrb[0].mxu0 %v1661
        %v2074 = vpop.f32.mrb[0].mxu0
        %v2075 = vadd.f32 0.0, %v2074
        %v2076 = vpop.f32.mrb[0].mxu0
        %v2077 = vpop.f32.mrb[0].mxu0
        %v2078 = vadd.f32 0.0, %v2077
        %v2079 = vpop.f32.mrb[0].mxu0
        %2080 = vmatprep.mubr.bf16.mxu0 0
        %2081 = vmatmul.mubr.bf16.gmra.mrb[0].mxu0 %v1664
        %v2082 = vpop.f32.mrb[0].mxu0
        %v2083 = vadd.f32 0.0, %v2082
        %v2084 = vpop.f32.mrb[0].mxu0
        %v2085 = vpop.f32.mrb[0].mxu0
        %v2086 = vadd.f32 0.0, %v2085
        %v2087 = vpop.f32.mrb[0].mxu0
        %2088 = vmatprep.mubr.bf16.mxu0 0
        %2089 = vmatmul.mubr.bf16.gmra.mrb[0].mxu0 %v1667
        %v2090 = vpop.f32.mrb[0].mxu0
        %v2091 = vadd.f32 0.0, %v2090
        %v2092 = vpop.f32.mrb[0].mxu0
        %v2093 = vpop.f32.mrb[0].mxu0
        %v2094 = vadd.f32 0.0, %v2093
        %v2095 = vpop.f32.mrb[0].mxu0
        %2096 = vmatprep.mubr.bf16.mxu0 0
        %2097 = vmatmul.mubr.bf16.gmra.mrb[0].mxu0 %v1670
        %v2098 = vpop.f32.mrb[0].mxu0
        %v2099 = vadd.f32 0.0, %v2098
        %v2100 = vpop.f32.mrb[0].mxu0
        %v2101 = vpop.f32.mrb[0].mxu0
        %v2102 = vadd.f32 0.0, %v2101
        %v2103 = vpop.f32.mrb[0].mxu0
        %2104 = vmatprep.mubr.bf16.mxu0 0
        %2105 = vmatmul.mubr.bf16.gmra.mrb[0].mxu0 %v1673
        %v2106 = vpop.f32.mrb[0].mxu0
        %v2107 = vadd.f32 0.0, %v2106
        %v2108 = vpop.f32.mrb[0].mxu0
        %v2109 = vpop.f32.mrb[0].mxu0
        %v2110 = vadd.f32 0.0, %v2109
        %v2111 = vpop.f32.mrb[0].mxu0
        %2112 = vmatprep.mubr.bf16.mxu0 0
        %2113 = vmatmul.mubr.bf16.gmra.mrb[0].mxu0 %v1676
        %v2114 = vpop.f32.mrb[0].mxu0
        %v2115 = vadd.f32 0.0, %v2114
        %v2116 = vpop.f32.mrb[0].mxu0
        %v2117 = vpop.f32.mrb[0].mxu0
        %v2118 = vadd.f32 0.0, %v2117
        %v2119 = vpop.f32.mrb[0].mxu0
        %2120 = vmatprep.mubr.bf16.mxu0 0
        %2121 = vmatmul.mubr.bf16.gmra.mrb[0].mxu0 %v1679
        %v2122 = vpop.f32.mrb[0].mxu0
        %v2123 = vadd.f32 0.0, %v2122
        %v2124 = vpop.f32.mrb[0].mxu0
        %v2125 = vpop.f32.mrb[0].mxu0
        %v2126 = vadd.f32 0.0, %v2125
        %v2127 = vpop.f32.mrb[0].mxu0
        %2128 = vmatprep.mubr.bf16.mxu0 0
        %2129 = vmatmul.mubr.bf16.gmra.mrb[0].mxu0 %v1682
        %v2130 = vpop.f32.mrb[0].mxu0
        %v2131 = vadd.f32 0.0, %v2130
        %v2132 = vpop.f32.mrb[0].mxu0
        %v2133 = vpop.f32.mrb[0].mxu0
        %v2134 = vadd.f32 0.0, %v2133
        %v2135 = vpop.f32.mrb[0].mxu0
        %2136 = vmatprep.mubr.bf16.mxu0 0
        %2137 = vmatmul.mubr.bf16.gmra.mrb[0].mxu0 %v1685
        %v2138 = vpop.f32.mrb[0].mxu0
        %v2139 = vadd.f32 0.0, %v2138
        %v2140 = vpop.f32.mrb[0].mxu0
        %v2141 = vpop.f32.mrb[0].mxu0
        %v2142 = vadd.f32 0.0, %v2141
        %v2143 = vpop.f32.mrb[0].mxu0
        %2144 = vmatprep.mubr.bf16.mxu0 0
        %2145 = vmatmul.mubr.bf16.gmra.mrb[0].mxu0 %v1688
        %v2146 = vpop.f32.mrb[0].mxu0
        %v2147 = vadd.f32 0.0, %v2146
        %v2148 = vpop.f32.mrb[0].mxu0
        %v2149 = vpop.f32.mrb[0].mxu0
        %v2150 = vadd.f32 0.0, %v2149
        %v2151 = vpop.f32.mrb[0].mxu0
        %2152 = vmatprep.mubr.bf16.mxu0 0
        %2153 = vmatmul.mubr.bf16.gmra.mrb[0].mxu0 %v1691
        %v2154 = vpop.f32.mrb[0].mxu0
        %v2155 = vadd.f32 0.0, %v2154
        %v2156 = vpop.f32.mrb[0].mxu0
        %v2157 = vpop.f32.mrb[0].mxu0
        %v2158 = vadd.f32 0.0, %v2157
        %v2159 = vpop.f32.mrb[0].mxu0
        %2160 = vmatprep.mubr.bf16.mxu0 0
        %2161 = vmatmul.mubr.bf16.gmra.mrb[0].mxu0 %v1694
        %v2162 = vpop.f32.mrb[0].mxu0
        %v2163 = vadd.f32 0.0, %v2162
        %v2164 = vpop.f32.mrb[0].mxu0
        %v2165 = vpop.f32.mrb[0].mxu0
        %v2166 = vadd.f32 0.0, %v2165
        %v2167 = vpop.f32.mrb[0].mxu0
        %2168 = vmatprep.mubr.bf16.mxu0 0
        %2169 = vmatmul.mubr.bf16.gmra.mrb[0].mxu0 %v1697
        %v2170 = vpop.f32.mrb[0].mxu0
        %v2171 = vadd.f32 0.0, %v2170
        %v2172 = vpop.f32.mrb[0].mxu0
        %v2173 = vpop.f32.mrb[0].mxu0
        %v2174 = vadd.f32 0.0, %v2173
        %v2175 = vpop.f32.mrb[0].mxu0
        %2176 = vmatprep.mubr.bf16.mxu0 0
        %2177 = vmatmul.mubr.bf16.gmra.mrb[0].mxu0 %v1700
        %v2178 = vpop.f32.mrb[0].mxu0
        %v2179 = vadd.f32 0.0, %v2178
        %v2180 = vpop.f32.mrb[0].mxu0
        %v2181 = vpop.f32.mrb[0].mxu0
        %v2182 = vadd.f32 0.0, %v2181
        %v2183 = vpop.f32.mrb[0].mxu0
        %2184 = vmatprep.mubr.bf16.mxu0 0
        %2185 = vmatmul.mubr.bf16.gmra.mrb[0].mxu0 %v1703
        %v2186 = vpop.f32.mrb[0].mxu0
        %v2187 = vadd.f32 0.0, %v2186
        %v2188 = vpop.f32.mrb[0].mxu0
        %v2189 = vpop.f32.mrb[0].mxu0
        %v2190 = vadd.f32 0.0, %v2189
        %v2191 = vpop.f32.mrb[0].mxu0
        %2192 = vmatprep.mubr.bf16.mxu0 0
        %2193 = vmatmul.mubr.bf16.gmra.mrb[0].mxu0 %v1706
        %v2194 = vpop.f32.mrb[0].mxu0
        %v2195 = vadd.f32 0.0, %v2194
        %v2196 = vpop.f32.mrb[0].mxu0
        %v2197 = vpop.f32.mrb[0].mxu0
        %v2198 = vadd.f32 0.0, %v2197
        %v2199 = vpop.f32.mrb[0].mxu0
        %2200 = vmatprep.mubr.bf16.mxu0 0
        %2201 = vmatmul.mubr.bf16.gmra.mrb[0].mxu0 %v1709
        %v2202 = vpop.f32.mrb[0].mxu0
        %v2203 = vadd.f32 0.0, %v2202
        %v2204 = vpop.f32.mrb[0].mxu0
        %v2205 = vpop.f32.mrb[0].mxu0
        %v2206 = vadd.f32 0.0, %v2205
        %v2207 = vpop.f32.mrb[0].mxu0
        %2208 = vdwg.mxu0
        %2209 = vst [vmem:[%s157] sm:$0xff] %v606
        %2210 = vst [vmem:[%s157 + $0x8] sm:$0xff] %v608
        %2211 = vst [vmem:[%s157 + $0x10] sm:$0xff] %v879
        %2212 = vst [vmem:[%s157 + $0x18] sm:$0xff] %v610
        %2213 = vst [vmem:[%s157 + $0x20] sm:$0xff] %v612
        %2214 = vst [vmem:[%s157 + $0x28] sm:$0xff] %v882
        %2215 = vst [vmem:[%s157 + $0x30] sm:$0xff] %v616
        %2216 = vst [vmem:[%s157 + $0x38] sm:$0xff] %v618
        %2217 = vst [vmem:[%s157 + $0x40] sm:$0xff] %v887
        %2218 = vst [vmem:[%s157 + $0x48] sm:$0xff] %v620
        %2219 = vst [vmem:[%s157 + $0x50] sm:$0xff] %v622
        %2220 = vst [vmem:[%s157 + $0x58] sm:$0xff] %v890
        %2221 = vst [vmem:[%s157 + $0x60] sm:$0xff] %v626
        %2222 = vst [vmem:[%s157 + $0x68] sm:$0xff] %v628
        %2223 = vst [vmem:[%s157 + $0x70] sm:$0xff] %v895
        %2224 = vst [vmem:[%s157 + $0x78] sm:$0xff] %v630
        %2225 = vst [vmem:[%s157 + $0x80] sm:$0xff] %v632
        %2226 = vst [vmem:[%s157 + $0x88] sm:$0xff] %v898
        %2227 = vst [vmem:[%s157 + $0x90] sm:$0xff] %v636
        %2228 = vst [vmem:[%s157 + $0x98] sm:$0xff] %v638
        %2229 = vst [vmem:[%s157 + $0xa0] sm:$0xff] %v903
        %2230 = vst [vmem:[%s157 + $0xa8] sm:$0xff] %v640
        %2231 = vst [vmem:[%s157 + $0xb0] sm:$0xff] %v642
        %2232 = vst [vmem:[%s157 + $0xb8] sm:$0xff] %v906
        %2233 = vst [vmem:[%s157 + $0xc0] sm:$0xff] %v646
        %2234 = vst [vmem:[%s157 + $0xc8] sm:$0xff] %v648
        %2235 = vst [vmem:[%s157 + $0xd0] sm:$0xff] %v911
        %2236 = vst [vmem:[%s157 + $0xd8] sm:$0xff] %v650
        %2237 = vst [vmem:[%s157 + $0xe0] sm:$0xff] %v652
        %2238 = vst [vmem:[%s157 + $0xe8] sm:$0xff] %v914
        %2239 = vst [vmem:[%s157 + $0xf0] sm:$0xff] %v656
        %2240 = vst [vmem:[%s157 + $0xf8] sm:$0xff] %v658
        %2241 = vst [vmem:[%s157 + $0x100] sm:$0xff] %v919
        %2242 = vst [vmem:[%s157 + $0x108] sm:$0xff] %v660
        %2243 = vst [vmem:[%s157 + $0x110] sm:$0xff] %v662
        %2244 = vst [vmem:[%s157 + $0x118] sm:$0xff] %v922
        %2245 = vst [vmem:[%s157 + $0x120] sm:$0xff] %v666
        %2246 = vst [vmem:[%s157 + $0x128] sm:$0xff] %v668
        %2247 = vst [vmem:[%s157 + $0x130] sm:$0xff] %v927
        %2248 = vst [vmem:[%s157 + $0x138] sm:$0xff] %v670
        %2249 = vst [vmem:[%s157 + $0x140] sm:$0xff] %v672
        %2250 = vst [vmem:[%s157 + $0x148] sm:$0xff] %v930
        %2251 = vst [vmem:[%s157 + $0x150] sm:$0xff] %v676
        %2252 = vst [vmem:[%s157 + $0x158] sm:$0xff] %v678
        %2253 = vst [vmem:[%s157 + $0x160] sm:$0xff] %v935
        %2254 = vst [vmem:[%s157 + $0x168] sm:$0xff] %v680
        %2255 = vst [vmem:[%s157 + $0x170] sm:$0xff] %v682
        %2256 = vst [vmem:[%s157 + $0x178] sm:$0xff] %v938
        %2257 = vst [vmem:[%s157 + $0x180] sm:$0xff] %v686
        %2258 = vst [vmem:[%s157 + $0x188] sm:$0xff] %v688
        %2259 = vst [vmem:[%s157 + $0x190] sm:$0xff] %v943
        %2260 = vst [vmem:[%s157 + $0x198] sm:$0xff] %v690
        %2261 = vst [vmem:[%s157 + $0x1a0] sm:$0xff] %v692
        %2262 = vst [vmem:[%s157 + $0x1a8] sm:$0xff] %v946
        %2263 = vst [vmem:[%s157 + $0x1b0] sm:$0xff] %v696
        %2264 = vst [vmem:[%s157 + $0x1b8] sm:$0xff] %v698
        %2265 = vst [vmem:[%s157 + $0x1c0] sm:$0xff] %v951
        %2266 = vst [vmem:[%s157 + $0x1c8] sm:$0xff] %v700
        %2267 = vst [vmem:[%s157 + $0x1d0] sm:$0xff] %v702
        %2268 = vst [vmem:[%s157 + $0x1d8] sm:$0xff] %v954
        %2269 = vst [vmem:[%s157 + $0x1e0] sm:$0xff] %v706
        %2270 = vst [vmem:[%s157 + $0x1e8] sm:$0xff] %v708
        %2271 = vst [vmem:[%s157 + $0x1f0] sm:$0xff] %v959
        %2272 = vst [vmem:[%s157 + $0x1f8] sm:$0xff] %v710
        %2273 = vst [vmem:[%s157 + $0x200] sm:$0xff] %v712
        %2274 = vst [vmem:[%s157 + $0x208] sm:$0xff] %v962
        %2275 = vst [vmem:[%s157 + $0x210] sm:$0xff] %v716
        %2276 = vst [vmem:[%s157 + $0x218] sm:$0xff] %v718
        %2277 = vst [vmem:[%s157 + $0x220] sm:$0xff] %v967
        %2278 = vst [vmem:[%s157 + $0x228] sm:$0xff] %v720
        %2279 = vst [vmem:[%s157 + $0x230] sm:$0xff] %v722
        %2280 = vst [vmem:[%s157 + $0x238] sm:$0xff] %v970
        %2281 = vst [vmem:[%s157 + $0x240] sm:$0xff] %v726
        %2282 = vst [vmem:[%s157 + $0x248] sm:$0xff] %v728
        %2283 = vst [vmem:[%s157 + $0x250] sm:$0xff] %v975
        %2284 = vst [vmem:[%s157 + $0x258] sm:$0xff] %v730
        %2285 = vst [vmem:[%s157 + $0x260] sm:$0xff] %v732
        %2286 = vst [vmem:[%s157 + $0x268] sm:$0xff] %v978
        %2287 = vst [vmem:[%s157 + $0x270] sm:$0xff] %v736
        %2288 = vst [vmem:[%s157 + $0x278] sm:$0xff] %v738
        %2289 = vst [vmem:[%s157 + $0x280] sm:$0xff] %v983
        %2290 = vst [vmem:[%s157 + $0x288] sm:$0xff] %v740
        %2291 = vst [vmem:[%s157 + $0x290] sm:$0xff] %v742
        %2292 = vst [vmem:[%s157 + $0x298] sm:$0xff] %v986
        %2293 = vst [vmem:[%s157 + $0x2a0] sm:$0xff] %v746
        %2294 = vst [vmem:[%s157 + $0x2a8] sm:$0xff] %v748
        %2295 = vst [vmem:[%s157 + $0x2b0] sm:$0xff] %v991
        %2296 = vst [vmem:[%s157 + $0x2b8] sm:$0xff] %v750
        %2297 = vst [vmem:[%s157 + $0x2c0] sm:$0xff] %v752
        %2298 = vst [vmem:[%s157 + $0x2c8] sm:$0xff] %v994
        %2299 = vst [vmem:[%s157 + $0x2d0] sm:$0xff] %v756
        %2300 = vst [vmem:[%s157 + $0x2d8] sm:$0xff] %v758
        %2301 = vst [vmem:[%s157 + $0x2e0] sm:$0xff] %v999
        %2302 = vst [vmem:[%s157 + $0x2e8] sm:$0xff] %v760
        %2303 = vst [vmem:[%s157 + $0x2f0] sm:$0xff] %v762
        %2304 = vst [vmem:[%s157 + $0x2f8] sm:$0xff] %v1002
        %2305 = vst [vmem:[%s157 + $0x300] sm:$0xff] %v766
        %2306 = vst [vmem:[%s157 + $0x308] sm:$0xff] %v768
        %2307 = vst [vmem:[%s157 + $0x310] sm:$0xff] %v1007
        %2308 = vst [vmem:[%s157 + $0x318] sm:$0xff] %v770
        %2309 = vst [vmem:[%s157 + $0x320] sm:$0xff] %v772
        %2310 = vst [vmem:[%s157 + $0x328] sm:$0xff] %v1010
        %2311 = vst [vmem:[%s157 + $0x330] sm:$0xff] %v776
        %2312 = vst [vmem:[%s157 + $0x338] sm:$0xff] %v778
        %2313 = vst [vmem:[%s157 + $0x340] sm:$0xff] %v1015
        %2314 = vst [vmem:[%s157 + $0x348] sm:$0xff] %v780
        %2315 = vst [vmem:[%s157 + $0x350] sm:$0xff] %v782
        %2316 = vst [vmem:[%s157 + $0x358] sm:$0xff] %v1018
        %2317 = vst [vmem:[%s157 + $0x360] sm:$0xff] %v786
        %2318 = vst [vmem:[%s157 + $0x368] sm:$0xff] %v788
        %2319 = vst [vmem:[%s157 + $0x370] sm:$0xff] %v1023
        %2320 = vst [vmem:[%s157 + $0x378] sm:$0xff] %v790
        %2321 = vst [vmem:[%s157 + $0x380] sm:$0xff] %v792
        %2322 = vst [vmem:[%s157 + $0x388] sm:$0xff] %v1026
        %2323 = vst [vmem:[%s157 + $0x390] sm:$0xff] %v796
        %2324 = vst [vmem:[%s157 + $0x398] sm:$0xff] %v798
        %2325 = vst [vmem:[%s157 + $0x3a0] sm:$0xff] %v1031
        %2326 = vst [vmem:[%s157 + $0x3a8] sm:$0xff] %v800
        %2327 = vst [vmem:[%s157 + $0x3b0] sm:$0xff] %v802
        %2328 = vst [vmem:[%s157 + $0x3b8] sm:$0xff] %v1034
        %2329 = vst [vmem:[%s157 + $0x3c0] sm:$0xff] %v806
        %2330 = vst [vmem:[%s157 + $0x3c8] sm:$0xff] %v808
        %2331 = vst [vmem:[%s157 + $0x3d0] sm:$0xff] %v1039
        %2332 = vst [vmem:[%s157 + $0x3d8] sm:$0xff] %v810
        %2333 = vst [vmem:[%s157 + $0x3e0] sm:$0xff] %v812
        %2334 = vst [vmem:[%s157 + $0x3e8] sm:$0xff] %v1042
        %2335 = vst [vmem:[%s157 + $0x3f0] sm:$0xff] %v816
        %2336 = vst [vmem:[%s157 + $0x3f8] sm:$0xff] %v818
        %2337 = vst [vmem:[%s157 + $0x400] sm:$0xff] %v1047
        %2338 = vst [vmem:[%s157 + $0x408] sm:$0xff] %v820
        %2339 = vst [vmem:[%s157 + $0x410] sm:$0xff] %v822
        %2340 = vst [vmem:[%s157 + $0x418] sm:$0xff] %v1050
        %2341 = vst [vmem:[%s157 + $0x420] sm:$0xff] %v826
        %2342 = vst [vmem:[%s157 + $0x428] sm:$0xff] %v828
        %2343 = vst [vmem:[%s157 + $0x430] sm:$0xff] %v1055
        %2344 = vst [vmem:[%s157 + $0x438] sm:$0xff] %v830
        %2345 = vst [vmem:[%s157 + $0x440] sm:$0xff] %v832
        %2346 = vst [vmem:[%s157 + $0x448] sm:$0xff] %v1058
        %2347 = vst [vmem:[%s157 + $0x450] sm:$0xff] %v836
        %2348 = vst [vmem:[%s157 + $0x458] sm:$0xff] %v838
        %2349 = vst [vmem:[%s157 + $0x460] sm:$0xff] %v1063
        %2350 = vst [vmem:[%s157 + $0x468] sm:$0xff] %v840
        %2351 = vst [vmem:[%s157 + $0x470] sm:$0xff] %v842
        %2352 = vst [vmem:[%s157 + $0x478] sm:$0xff] %v1066
        %2353 = vst [vmem:[%s157 + $0x480] sm:$0xff] %v1176
        %2354 = vst [vmem:[%s157 + $0x488] sm:$0xff] %v1178
        %2355 = vst [vmem:[%s157 + $0x490] sm:$0xff] %v1449
        %2356 = vst [vmem:[%s157 + $0x498] sm:$0xff] %v1180
        %2357 = vst [vmem:[%s157 + $0x4a0] sm:$0xff] %v1182
        %2358 = vst [vmem:[%s157 + $0x4a8] sm:$0xff] %v1452
        %2359 = vst [vmem:[%s157 + $0x4b0] sm:$0xff] %v1186
        %2360 = vst [vmem:[%s157 + $0x4b8] sm:$0xff] %v1188
        %2361 = vst [vmem:[%s157 + $0x4c0] sm:$0xff] %v1457
        %2362 = vst [vmem:[%s157 + $0x4c8] sm:$0xff] %v1190
        %2363 = vst [vmem:[%s157 + $0x4d0] sm:$0xff] %v1192
        %2364 = vst [vmem:[%s157 + $0x4d8] sm:$0xff] %v1460
        %2365 = vst [vmem:[%s157 + $0x4e0] sm:$0xff] %v1196
        %2366 = vst [vmem:[%s157 + $0x4e8] sm:$0xff] %v1198
        %2367 = vst [vmem:[%s157 + $0x4f0] sm:$0xff] %v1465
        %2368 = vst [vmem:[%s157 + $0x4f8] sm:$0xff] %v1200
        %2369 = vst [vmem:[%s157 + $0x500] sm:$0xff] %v1202
        %2370 = vst [vmem:[%s157 + $0x508] sm:$0xff] %v1468
        %2371 = vst [vmem:[%s157 + $0x510] sm:$0xff] %v1206
        %2372 = vst [vmem:[%s157 + $0x518] sm:$0xff] %v1208
        %2373 = vst [vmem:[%s157 + $0x520] sm:$0xff] %v1473
        %2374 = vst [vmem:[%s157 + $0x528] sm:$0xff] %v1210
        %2375 = vst [vmem:[%s157 + $0x530] sm:$0xff] %v1212
        %2376 = vst [vmem:[%s157 + $0x538] sm:$0xff] %v1476
        %2377 = vst [vmem:[%s157 + $0x540] sm:$0xff] %v1216
        %2378 = vst [vmem:[%s157 + $0x548] sm:$0xff] %v1218
        %2379 = vst [vmem:[%s157 + $0x550] sm:$0xff] %v1481
        %2380 = vst [vmem:[%s157 + $0x558] sm:$0xff] %v1220
        %2381 = vst [vmem:[%s157 + $0x560] sm:$0xff] %v1222
        %2382 = vst [vmem:[%s157 + $0x568] sm:$0xff] %v1484
        %2383 = vst [vmem:[%s157 + $0x570] sm:$0xff] %v1226
        %2384 = vst [vmem:[%s157 + $0x578] sm:$0xff] %v1228
        %2385 = vst [vmem:[%s157 + $0x580] sm:$0xff] %v1489
        %2386 = vst [vmem:[%s157 + $0x588] sm:$0xff] %v1230
        %2387 = vst [vmem:[%s157 + $0x590] sm:$0xff] %v1232
        %2388 = vst [vmem:[%s157 + $0x598] sm:$0xff] %v1492
        %2389 = vst [vmem:[%s157 + $0x5a0] sm:$0xff] %v1236
        %2390 = vst [vmem:[%s157 + $0x5a8] sm:$0xff] %v1238
        %2391 = vst [vmem:[%s157 + $0x5b0] sm:$0xff] %v1497
        %2392 = vst [vmem:[%s157 + $0x5b8] sm:$0xff] %v1240
        %2393 = vst [vmem:[%s157 + $0x5c0] sm:$0xff] %v1242
        %2394 = vst [vmem:[%s157 + $0x5c8] sm:$0xff] %v1500
        %2395 = vst [vmem:[%s157 + $0x5d0] sm:$0xff] %v1246
        %2396 = vst [vmem:[%s157 + $0x5d8] sm:$0xff] %v1248
        %2397 = vst [vmem:[%s157 + $0x5e0] sm:$0xff] %v1505
        %2398 = vst [vmem:[%s157 + $0x5e8] sm:$0xff] %v1250
        %2399 = vst [vmem:[%s157 + $0x5f0] sm:$0xff] %v1252
        %2400 = vst [vmem:[%s157 + $0x5f8] sm:$0xff] %v1508
        %2401 = vst [vmem:[%s157 + $0x600] sm:$0xff] %v1256
        %2402 = vst [vmem:[%s157 + $0x608] sm:$0xff] %v1258
        %2403 = vst [vmem:[%s157 + $0x610] sm:$0xff] %v1513
        %2404 = vst [vmem:[%s157 + $0x618] sm:$0xff] %v1260
        %2405 = vst [vmem:[%s157 + $0x620] sm:$0xff] %v1262
        %2406 = vst [vmem:[%s157 + $0x628] sm:$0xff] %v1516
        %2407 = vst [vmem:[%s157 + $0x630] sm:$0xff] %v1266
        %2408 = vst [vmem:[%s157 + $0x638] sm:$0xff] %v1268
        %2409 = vst [vmem:[%s157 + $0x640] sm:$0xff] %v1521
        %2410 = vst [vmem:[%s157 + $0x648] sm:$0xff] %v1270
        %2411 = vst [vmem:[%s157 + $0x650] sm:$0xff] %v1272
        %2412 = vst [vmem:[%s157 + $0x658] sm:$0xff] %v1524
        %2413 = vst [vmem:[%s157 + $0x660] sm:$0xff] %v1276
        %2414 = vst [vmem:[%s157 + $0x668] sm:$0xff] %v1278
        %2415 = vst [vmem:[%s157 + $0x670] sm:$0xff] %v1529
        %2416 = vst [vmem:[%s157 + $0x678] sm:$0xff] %v1280
        %2417 = vst [vmem:[%s157 + $0x680] sm:$0xff] %v1282
        %2418 = vst [vmem:[%s157 + $0x688] sm:$0xff] %v1532
        %2419 = vst [vmem:[%s157 + $0x690] sm:$0xff] %v1286
        %2420 = vst [vmem:[%s157 + $0x698] sm:$0xff] %v1288
        %2421 = vst [vmem:[%s157 + $0x6a0] sm:$0xff] %v1537
        %2422 = vst [vmem:[%s157 + $0x6a8] sm:$0xff] %v1290
        %2423 = vst [vmem:[%s157 + $0x6b0] sm:$0xff] %v1292
        %2424 = vst [vmem:[%s157 + $0x6b8] sm:$0xff] %v1540
        %2425 = vst [vmem:[%s157 + $0x6c0] sm:$0xff] %v1296
        %2426 = vst [vmem:[%s157 + $0x6c8] sm:$0xff] %v1298
        %2427 = vst [vmem:[%s157 + $0x6d0] sm:$0xff] %v1545
        %2428 = vst [vmem:[%s157 + $0x6d8] sm:$0xff] %v1300
        %2429 = vst [vmem:[%s157 + $0x6e0] sm:$0xff] %v1302
        %2430 = vst [vmem:[%s157 + $0x6e8] sm:$0xff] %v1548
        %2431 = vst [vmem:[%s157 + $0x6f0] sm:$0xff] %v1306
        %2432 = vst [vmem:[%s157 + $0x6f8] sm:$0xff] %v1308
        %2433 = vst [vmem:[%s157 + $0x700] sm:$0xff] %v1553
        %2434 = vst [vmem:[%s157 + $0x708] sm:$0xff] %v1310
        %2435 = vst [vmem:[%s157 + $0x710] sm:$0xff] %v1312
        %2436 = vst [vmem:[%s157 + $0x718] sm:$0xff] %v1556
        %2437 = vst [vmem:[%s157 + $0x720] sm:$0xff] %v1316
        %2438 = vst [vmem:[%s157 + $0x728] sm:$0xff] %v1318
        %2439 = vst [vmem:[%s157 + $0x730] sm:$0xff] %v1561
        %2440 = vst [vmem:[%s157 + $0x738] sm:$0xff] %v1320
        %2441 = vst [vmem:[%s157 + $0x740] sm:$0xff] %v1322
        %2442 = vst [vmem:[%s157 + $0x748] sm:$0xff] %v1564
        %2443 = vst [vmem:[%s157 + $0x750] sm:$0xff] %v1326
        %2444 = vst [vmem:[%s157 + $0x758] sm:$0xff] %v1328
        %2445 = vst [vmem:[%s157 + $0x760] sm:$0xff] %v1569
        %2446 = vst [vmem:[%s157 + $0x768] sm:$0xff] %v1330
        %2447 = vst [vmem:[%s157 + $0x770] sm:$0xff] %v1332
        %2448 = vst [vmem:[%s157 + $0x778] sm:$0xff] %v1572
        %2449 = vst [vmem:[%s157 + $0x780] sm:$0xff] %v1336
        %2450 = vst [vmem:[%s157 + $0x788] sm:$0xff] %v1338
        %2451 = vst [vmem:[%s157 + $0x790] sm:$0xff] %v1577
        %2452 = vst [vmem:[%s157 + $0x798] sm:$0xff] %v1340
        %2453 = vst [vmem:[%s157 + $0x7a0] sm:$0xff] %v1342
        %2454 = vst [vmem:[%s157 + $0x7a8] sm:$0xff] %v1580
        %2455 = vst [vmem:[%s157 + $0x7b0] sm:$0xff] %v1346
        %2456 = vst [vmem:[%s157 + $0x7b8] sm:$0xff] %v1348
        %2457 = vst [vmem:[%s157 + $0x7c0] sm:$0xff] %v1585
        %2458 = vst [vmem:[%s157 + $0x7c8] sm:$0xff] %v1350
        %2459 = vst [vmem:[%s157 + $0x7d0] sm:$0xff] %v1352
        %2460 = vst [vmem:[%s157 + $0x7d8] sm:$0xff] %v1588
        %2461 = vst [vmem:[%s157 + $0x7e0] sm:$0xff] %v1356
        %2462 = vst [vmem:[%s157 + $0x7e8] sm:$0xff] %v1358
        %2463 = vst [vmem:[%s157 + $0x7f0] sm:$0xff] %v1593
        %2464 = vst [vmem:[%s157 + $0x7f8] sm:$0xff] %v1360
        %2465 = vst [vmem:[%s157 + $0x800] sm:$0xff] %v1362
        %2466 = vst [vmem:[%s157 + $0x808] sm:$0xff] %v1596
        %2467 = vst [vmem:[%s157 + $0x810] sm:$0xff] %v1366
        %2468 = vst [vmem:[%s157 + $0x818] sm:$0xff] %v1368
        %2469 = vst [vmem:[%s157 + $0x820] sm:$0xff] %v1601
        %2470 = vst [vmem:[%s157 + $0x828] sm:$0xff] %v1370
        %2471 = vst [vmem:[%s157 + $0x830] sm:$0xff] %v1372
        %2472 = vst [vmem:[%s157 + $0x838] sm:$0xff] %v1604
        %2473 = vst [vmem:[%s157 + $0x840] sm:$0xff] %v1376
        %2474 = vst [vmem:[%s157 + $0x848] sm:$0xff] %v1378
        %2475 = vst [vmem:[%s157 + $0x850] sm:$0xff] %v1609
        %2476 = vst [vmem:[%s157 + $0x858] sm:$0xff] %v1380
        %2477 = vst [vmem:[%s157 + $0x860] sm:$0xff] %v1382
        %2478 = vst [vmem:[%s157 + $0x868] sm:$0xff] %v1612
        %2479 = vst [vmem:[%s157 + $0x870] sm:$0xff] %v1386
        %2480 = vst [vmem:[%s157 + $0x878] sm:$0xff] %v1388
        %2481 = vst [vmem:[%s157 + $0x880] sm:$0xff] %v1617
        %2482 = vst [vmem:[%s157 + $0x888] sm:$0xff] %v1390
        %2483 = vst [vmem:[%s157 + $0x890] sm:$0xff] %v1392
        %2484 = vst [vmem:[%s157 + $0x898] sm:$0xff] %v1620
        %2485 = vst [vmem:[%s157 + $0x8a0] sm:$0xff] %v1396
        %2486 = vst [vmem:[%s157 + $0x8a8] sm:$0xff] %v1398
        %2487 = vst [vmem:[%s157 + $0x8b0] sm:$0xff] %v1625
        %2488 = vst [vmem:[%s157 + $0x8b8] sm:$0xff] %v1400
        %2489 = vst [vmem:[%s157 + $0x8c0] sm:$0xff] %v1402
        %2490 = vst [vmem:[%s157 + $0x8c8] sm:$0xff] %v1628
        %2491 = vst [vmem:[%s157 + $0x8d0] sm:$0xff] %v1406
        %2492 = vst [vmem:[%s157 + $0x8d8] sm:$0xff] %v1408
        %2493 = vst [vmem:[%s157 + $0x8e0] sm:$0xff] %v1633
        %2494 = vst [vmem:[%s157 + $0x8e8] sm:$0xff] %v1410
        %2495 = vst [vmem:[%s157 + $0x8f0] sm:$0xff] %v1412
        %2496 = vst [vmem:[%s157 + $0x8f8] sm:$0xff] %v1636
        %2497 = vst [vmem:[%s157 + $0x900] sm:$0xff] %v1746
        %2498 = vst [vmem:[%s157 + $0x908] sm:$0xff] %v1748
        %2499 = vst [vmem:[%s157 + $0x910] sm:$0xff] %v2019
        %2500 = vst [vmem:[%s157 + $0x918] sm:$0xff] %v1750
        %2501 = vst [vmem:[%s157 + $0x920] sm:$0xff] %v1752
        %2502 = vst [vmem:[%s157 + $0x928] sm:$0xff] %v2022
        %2503 = vst [vmem:[%s157 + $0x930] sm:$0xff] %v1756
        %2504 = vst [vmem:[%s157 + $0x938] sm:$0xff] %v1758
        %2505 = vst [vmem:[%s157 + $0x940] sm:$0xff] %v2027
        %2506 = vst [vmem:[%s157 + $0x948] sm:$0xff] %v1760
        %2507 = vst [vmem:[%s157 + $0x950] sm:$0xff] %v1762
        %2508 = vst [vmem:[%s157 + $0x958] sm:$0xff] %v2030
        %2509 = vst [vmem:[%s157 + $0x960] sm:$0xff] %v1766
        %2510 = vst [vmem:[%s157 + $0x968] sm:$0xff] %v1768
        %2511 = vst [vmem:[%s157 + $0x970] sm:$0xff] %v2035
        %2512 = vst [vmem:[%s157 + $0x978] sm:$0xff] %v1770
        %2513 = vst [vmem:[%s157 + $0x980] sm:$0xff] %v1772
        %2514 = vst [vmem:[%s157 + $0x988] sm:$0xff] %v2038
        %2515 = vst [vmem:[%s157 + $0x990] sm:$0xff] %v1776
        %2516 = vst [vmem:[%s157 + $0x998] sm:$0xff] %v1778
        %2517 = vst [vmem:[%s157 + $0x9a0] sm:$0xff] %v2043
        %2518 = vst [vmem:[%s157 + $0x9a8] sm:$0xff] %v1780
        %2519 = vst [vmem:[%s157 + $0x9b0] sm:$0xff] %v1782
        %2520 = vst [vmem:[%s157 + $0x9b8] sm:$0xff] %v2046
        %2521 = vst [vmem:[%s157 + $0x9c0] sm:$0xff] %v1786
        %2522 = vst [vmem:[%s157 + $0x9c8] sm:$0xff] %v1788
        %2523 = vst [vmem:[%s157 + $0x9d0] sm:$0xff] %v2051
        %2524 = vst [vmem:[%s157 + $0x9d8] sm:$0xff] %v1790
        %2525 = vst [vmem:[%s157 + $0x9e0] sm:$0xff] %v1792
        %2526 = vst [vmem:[%s157 + $0x9e8] sm:$0xff] %v2054
        %2527 = vst [vmem:[%s157 + $0x9f0] sm:$0xff] %v1796
        %2528 = vst [vmem:[%s157 + $0x9f8] sm:$0xff] %v1798
        %2529 = vst [vmem:[%s157 + $0xa00] sm:$0xff] %v2059
        %2530 = vst [vmem:[%s157 + $0xa08] sm:$0xff] %v1800
        %2531 = vst [vmem:[%s157 + $0xa10] sm:$0xff] %v1802
        %2532 = vst [vmem:[%s157 + $0xa18] sm:$0xff] %v2062
        %2533 = vst [vmem:[%s157 + $0xa20] sm:$0xff] %v1806
        %2534 = vst [vmem:[%s157 + $0xa28] sm:$0xff] %v1808
        %2535 = vst [vmem:[%s157 + $0xa30] sm:$0xff] %v2067
        %2536 = vst [vmem:[%s157 + $0xa38] sm:$0xff] %v1810
        %2537 = vst [vmem:[%s157 + $0xa40] sm:$0xff] %v1812
        %2538 = vst [vmem:[%s157 + $0xa48] sm:$0xff] %v2070
        %2539 = vst [vmem:[%s157 + $0xa50] sm:$0xff] %v1816
        %2540 = vst [vmem:[%s157 + $0xa58] sm:$0xff] %v1818
        %2541 = vst [vmem:[%s157 + $0xa60] sm:$0xff] %v2075
        %2542 = vst [vmem:[%s157 + $0xa68] sm:$0xff] %v1820
        %2543 = vst [vmem:[%s157 + $0xa70] sm:$0xff] %v1822
        %2544 = vst [vmem:[%s157 + $0xa78] sm:$0xff] %v2078
        %2545 = vst [vmem:[%s157 + $0xa80] sm:$0xff] %v1826
        %2546 = vst [vmem:[%s157 + $0xa88] sm:$0xff] %v1828
        %2547 = vst [vmem:[%s157 + $0xa90] sm:$0xff] %v2083
        %2548 = vst [vmem:[%s157 + $0xa98] sm:$0xff] %v1830
        %2549 = vst [vmem:[%s157 + $0xaa0] sm:$0xff] %v1832
        %2550 = vst [vmem:[%s157 + $0xaa8] sm:$0xff] %v2086
        %2551 = vst [vmem:[%s157 + $0xab0] sm:$0xff] %v1836
        %2552 = vst [vmem:[%s157 + $0xab8] sm:$0xff] %v1838
        %2553 = vst [vmem:[%s157 + $0xac0] sm:$0xff] %v2091
        %2554 = vst [vmem:[%s157 + $0xac8] sm:$0xff] %v1840
        %2555 = vst [vmem:[%s157 + $0xad0] sm:$0xff] %v1842
        %2556 = vst [vmem:[%s157 + $0xad8] sm:$0xff] %v2094
        %2557 = vst [vmem:[%s157 + $0xae0] sm:$0xff] %v1846
        %2558 = vst [vmem:[%s157 + $0xae8] sm:$0xff] %v1848
        %2559 = vst [vmem:[%s157 + $0xaf0] sm:$0xff] %v2099
        %2560 = vst [vmem:[%s157 + $0xaf8] sm:$0xff] %v1850
        %2561 = vst [vmem:[%s157 + $0xb00] sm:$0xff] %v1852
        %2562 = vst [vmem:[%s157 + $0xb08] sm:$0xff] %v2102
        %2563 = vst [vmem:[%s157 + $0xb10] sm:$0xff] %v1856
        %2564 = vst [vmem:[%s157 + $0xb18] sm:$0xff] %v1858
        %2565 = vst [vmem:[%s157 + $0xb20] sm:$0xff] %v2107
        %2566 = vst [vmem:[%s157 + $0xb28] sm:$0xff] %v1860
        %2567 = vst [vmem:[%s157 + $0xb30] sm:$0xff] %v1862
        %2568 = vst [vmem:[%s157 + $0xb38] sm:$0xff] %v2110
        %2569 = vst [vmem:[%s157 + $0xb40] sm:$0xff] %v1866
        %2570 = vst [vmem:[%s157 + $0xb48] sm:$0xff] %v1868
        %2571 = vst [vmem:[%s157 + $0xb50] sm:$0xff] %v2115
        %2572 = vst [vmem:[%s157 + $0xb58] sm:$0xff] %v1870
        %2573 = vst [vmem:[%s157 + $0xb60] sm:$0xff] %v1872
        %2574 = vst [vmem:[%s157 + $0xb68] sm:$0xff] %v2118
        %2575 = vst [vmem:[%s157 + $0xb70] sm:$0xff] %v1876
        %2576 = vst [vmem:[%s157 + $0xb78] sm:$0xff] %v1878
        %2577 = vst [vmem:[%s157 + $0xb80] sm:$0xff] %v2123
        %2578 = vst [vmem:[%s157 + $0xb88] sm:$0xff] %v1880
        %2579 = vst [vmem:[%s157 + $0xb90] sm:$0xff] %v1882
        %2580 = vst [vmem:[%s157 + $0xb98] sm:$0xff] %v2126
        %2581 = vst [vmem:[%s157 + $0xba0] sm:$0xff] %v1886
        %2582 = vst [vmem:[%s157 + $0xba8] sm:$0xff] %v1888
        %2583 = vst [vmem:[%s157 + $0xbb0] sm:$0xff] %v2131
        %2584 = vst [vmem:[%s157 + $0xbb8] sm:$0xff] %v1890
        %2585 = vst [vmem:[%s157 + $0xbc0] sm:$0xff] %v1892
        %2586 = vst [vmem:[%s157 + $0xbc8] sm:$0xff] %v2134
        %2587 = vst [vmem:[%s157 + $0xbd0] sm:$0xff] %v1896
        %2588 = vst [vmem:[%s157 + $0xbd8] sm:$0xff] %v1898
        %2589 = vst [vmem:[%s157 + $0xbe0] sm:$0xff] %v2139
        %2590 = vst [vmem:[%s157 + $0xbe8] sm:$0xff] %v1900
        %2591 = vst [vmem:[%s157 + $0xbf0] sm:$0xff] %v1902
        %2592 = vst [vmem:[%s157 + $0xbf8] sm:$0xff] %v2142
        %2593 = vst [vmem:[%s157 + $0xc00] sm:$0xff] %v1906
        %2594 = vst [vmem:[%s157 + $0xc08] sm:$0xff] %v1908
        %2595 = vst [vmem:[%s157 + $0xc10] sm:$0xff] %v2147
        %2596 = vst [vmem:[%s157 + $0xc18] sm:$0xff] %v1910
        %2597 = vst [vmem:[%s157 + $0xc20] sm:$0xff] %v1912
        %2598 = vst [vmem:[%s157 + $0xc28] sm:$0xff] %v2150
        %2599 = vst [vmem:[%s157 + $0xc30] sm:$0xff] %v1916
        %2600 = vst [vmem:[%s157 + $0xc38] sm:$0xff] %v1918
        %2601 = vst [vmem:[%s157 + $0xc40] sm:$0xff] %v2155
        %2602 = vst [vmem:[%s157 + $0xc48] sm:$0xff] %v1920
        %2603 = vst [vmem:[%s157 + $0xc50] sm:$0xff] %v1922
        %2604 = vst [vmem:[%s157 + $0xc58] sm:$0xff] %v2158
        %2605 = vst [vmem:[%s157 + $0xc60] sm:$0xff] %v1926
        %2606 = vst [vmem:[%s157 + $0xc68] sm:$0xff] %v1928
        %2607 = vst [vmem:[%s157 + $0xc70] sm:$0xff] %v2163
        %2608 = vst [vmem:[%s157 + $0xc78] sm:$0xff] %v1930
        %2609 = vst [vmem:[%s157 + $0xc80] sm:$0xff] %v1932
        %2610 = vst [vmem:[%s157 + $0xc88] sm:$0xff] %v2166
        %2611 = vst [vmem:[%s157 + $0xc90] sm:$0xff] %v1936
        %2612 = vst [vmem:[%s157 + $0xc98] sm:$0xff] %v1938
        %2613 = vst [vmem:[%s157 + $0xca0] sm:$0xff] %v2171
        %2614 = vst [vmem:[%s157 + $0xca8] sm:$0xff] %v1940
        %2615 = vst [vmem:[%s157 + $0xcb0] sm:$0xff] %v1942
        %2616 = vst [vmem:[%s157 + $0xcb8] sm:$0xff] %v2174
        %2617 = vst [vmem:[%s157 + $0xcc0] sm:$0xff] %v1946
        %2618 = vst [vmem:[%s157 + $0xcc8] sm:$0xff] %v1948
        %2619 = vst [vmem:[%s157 + $0xcd0] sm:$0xff] %v2179
        %2620 = vst [vmem:[%s157 + $0xcd8] sm:$0xff] %v1950
        %2621 = vst [vmem:[%s157 + $0xce0] sm:$0xff] %v1952
        %2622 = vst [vmem:[%s157 + $0xce8] sm:$0xff] %v2182
        %2623 = vst [vmem:[%s157 + $0xcf0] sm:$0xff] %v1956
        %2624 = vst [vmem:[%s157 + $0xcf8] sm:$0xff] %v1958
        %2625 = vst [vmem:[%s157 + $0xd00] sm:$0xff] %v2187
        %2626 = vst [vmem:[%s157 + $0xd08] sm:$0xff] %v1960
        %2627 = vst [vmem:[%s157 + $0xd10] sm:$0xff] %v1962
        %2628 = vst [vmem:[%s157 + $0xd18] sm:$0xff] %v2190
        %2629 = vst [vmem:[%s157 + $0xd20] sm:$0xff] %v1966
        %2630 = vst [vmem:[%s157 + $0xd28] sm:$0xff] %v1968
        %2631 = vst [vmem:[%s157 + $0xd30] sm:$0xff] %v2195
        %2632 = vst [vmem:[%s157 + $0xd38] sm:$0xff] %v1970
        %2633 = vst [vmem:[%s157 + $0xd40] sm:$0xff] %v1972
        %2634 = vst [vmem:[%s157 + $0xd48] sm:$0xff] %v2198
        %2635 = vst [vmem:[%s157 + $0xd50] sm:$0xff] %v1976
        %2636 = vst [vmem:[%s157 + $0xd58] sm:$0xff] %v1978
        %2637 = vst [vmem:[%s157 + $0xd60] sm:$0xff] %v2203
        %2638 = vst [vmem:[%s157 + $0xd68] sm:$0xff] %v1980
        %2639 = vst [vmem:[%s157 + $0xd70] sm:$0xff] %v1982
        %2640 = vst [vmem:[%s157 + $0xd78] sm:$0xff] %v2206
        %s2641 = sand.u32 %s76, 1
        %s2642 = scalar_lea.sflag [#allocation3], %s2641
        %s2643 = sand.u32 %s76, 1
        %s2644 = smul.addr %s2643, 3456
        %s2645 = scalar_lea.vmem [#allocation2], %s2644
        // Predicated region
        $region29: #{tpu_custom_call.1} parent=27 // pred_check
          %p2646 = pneg %p86
        $region30: #{tpu_custom_call.1} parent=27 // pred_check_branch
          %2648 = sbr.rel (%p2646) target = $region32
        $region31: #{tpu_custom_call.1} parent=27 // pred_region
          %s2649 = smul.u32 3, %s16
          %s2651 = ssub.s32 55296, 55296
          %2652 = vsyncadd %s2642, %s2651
          %s2653 = smul.addr %s2649, 144
          %s2654 = smul.addr %s2653, 128
          %s2655 = scalar_lea.hbm %s2, %s2654
          %s2656 = sshll.u32 %s2645, 4
          %s2657 = int_to_ptr.vmem [resolvable:$true] %s2656
          %2662 = dma.vmem_to_hbm [thread:$0]  %s2657, 55296, %s2655, %s2642, 384, 384, 24
        $region32: #{tpu_custom_call.1} parent=27 // pred_fallthru
          _
      $region28: #{tpu_custom_call.1} parent=5 // pred_fallthru
        _
      %p2663 = scmp.le.s32.totalorder 2, %s11
      // Predicated region
      $region33: #{tpu_custom_call.1} parent=5 // pred_check
        %p2664 = pneg %p2663
      $region34: #{tpu_custom_call.1} parent=5 // pred_check_branch
        %2666 = sbr.rel (%p2664) target = $region36
      $region35: #{tpu_custom_call.1} parent=5 // pred_region
        %s2667 = ssub.s32 %s11, 2
        // Predicated region
        $region37: #{tpu_custom_call.1} parent=35 // pred_check
          %p2668 = pneg %p92
        $region38: #{tpu_custom_call.1} parent=35 // pred_check_branch
          %2670 = sbr.rel (%p2668) target = $region40
        $region39: #{tpu_custom_call.1} parent=35 // pred_region
          %s2671 = sand.u32 %s77, 1
          %s2672 = scalar_lea.sflag [#allocation3], %s2671
          %s2673 = sand.u32 %s77, 1
          %s2674 = smul.addr %s2673, 3456
          %s2675 = scalar_lea.vmem [#allocation2], %s2674
          %2676 = dma.done %s2672, 55296
        $region40: #{tpu_custom_call.1} parent=35 // pred_fallthru
          _
      $region36: #{tpu_custom_call.1} parent=5 // pred_fallthru
        _
    $region6: #{tpu_custom_call.1} parent=1 // loop_footer
      %s15 = sadd.s32 1, %s11
    $region7: #{tpu_custom_call.1} parent=1 // loop_footer_branch
      %10 = sbr.rel target = $region3
    $region8: #{tpu_custom_call.1} parent=1 // loop_exit
      _
    %2677 = vsyncpa [#allocation3], 1
    %s2678 = scalar_lea.sflag [#allocation3], 1
    %2679 = vsyncpa %s2678, 1

</llo_original>
